<compile_context>
chip_gen: v5e
topology: v5e:2x2
jax: 0.10.0
libtpu: 0.0.40
codegen_flags: <defaults>
</compile_context>

<pallas_src>
import math
import functools

import jax
import jax.numpy as jnp
from jax.experimental import pallas as pl
from jax.experimental.pallas import tpu as pltpu


def _mha_kernel(x_q_ref, x_kv_ref, bias_ref,
                wq_ref, bq_ref, wk_ref, bk_ref, wv_ref, bv_ref,
                wo_ref, bo_ref,
                o_ref,
                k_scr, v_scr, q_scr, ctx_scr,
                *, n_heads, dim_per_head, approx_recip):
    qi = pl.program_id(1)
    h, dph = n_heads, dim_per_head

    # ---- K/V projections once per batch element (q-tile axis is the inner,
    #      "arbitrary" grid axis; scratch persists across grid steps).
    #      Full-width (klen,dim)@(dim,dim) GEMMs keep the MXU busy; the
    #      head-major layout is then built with static per-head lane-slice
    #      copies (no transpose relayout).
    @pl.when(qi == 0)
    def _():
        xk = x_kv_ref[0]                                          # (klen, dim)
        k = jnp.dot(xk, wk_ref[...],
                    preferred_element_type=jnp.float32) + bk_ref[0]
        v = jnp.dot(xk, wv_ref[...],
                    preferred_element_type=jnp.float32) + bv_ref[0]
        kc = k.astype(k_scr.dtype)
        vc = v.astype(v_scr.dtype)
        for hh in range(h):
            sl = slice(hh * dph, (hh + 1) * dph)
            k_scr[hh] = kc[:, sl]                                 # (klen, dph)
            v_scr[hh] = vc[:, sl]

    # ---- Q projection for this query tile (1/sqrt(dph) folded into wq/bq),
    #      same per-head slice-copy into head-major scratch.
    xq = x_q_ref[0]                                               # (TQ, dim)
    q = jnp.dot(xq, wq_ref[...],
                preferred_element_type=jnp.float32) + bq_ref[0]
    qc = q.astype(q_scr.dtype)
    for hh in range(h):
        q_scr[hh] = qc[:, hh * dph:(hh + 1) * dph]                # (TQ, dph)

    q3 = q_scr[...]                                               # (H, TQ, dph)
    k3 = k_scr[...]                                               # (H, klen, dph)
    v3 = v_scr[...]

    # ---- Scores: batched over heads, contraction on the last axes.
    #      NOTE: for dph < 128/256 the contraction lanes of the MXU are
    #      under-filled; this is the structural ceiling of head-major attention
    #      for small heads (documented, accepted).
    s = jnp.einsum('hqd,hkd->hqk', q3, k3,
                   preferred_element_type=jnp.float32)            # (H,TQ,klen) f32
    s = s + bias_ref[0]                                           # additive mask bias

    # ---- Softmax over keys (f32), normalization deferred to the context:
    #      normalizing ctx (H*TQ*dph values) instead of p (H*TQ*klen values)
    #      cuts the VPU work on the softmax path by klen/dph.
    m = jnp.max(s, axis=-1, keepdims=True)
    p = jnp.exp(s - m)                                            # unnormalized
    denom = jnp.sum(p, axis=-1, keepdims=True)

    ctx3 = jnp.einsum('hqk,hkd->hqd', p.astype(v3.dtype), v3,
                      preferred_element_type=jnp.float32)         # (H,TQ,dph)
    ctx3 = ctx3 * pl.reciprocal(denom, approx=approx_recip)

    # ---- Re-assemble (TQ, dim) context via per-head lane-slice stores (no
    #      transpose), then a single full-width output GEMM.
    for hh in range(h):
        ctx_scr[:, hh * dph:(hh + 1) * dph] = ctx3[hh].astype(ctx_scr.dtype)

    out = jnp.dot(ctx_scr[...], wo_ref[...],
                  preferred_element_type=jnp.float32) + bo_ref[0]
    o_ref[0] = out.astype(o_ref.dtype)


def multi_head_attention(x, mask, params, n_heads, *, tq=None,
                         compute_dtype=jnp.bfloat16):
    """x: (bs, qlen, dim); mask: (bs, klen) with 1 keep / 0 mask (self-attention).

    compute_dtype: dtype of MXU operands (bf16 recommended; accumulation is
    always f32). Pass jnp.float32 for exact-parity testing.
    """
    bs, qlen, dim = x.shape
    klen = mask.shape[-1]
    assert dim % n_heads == 0
    assert klen == qlen, "self-attention path only (kv=None, cache=None)"
    dph = dim // n_heads

    if tq is None:
        # 256 matches the v6e/v7x 256-wide MXU; pass tq=128 explicitly on v5e.
        if qlen % 256 == 0:
            tq = 256
        elif qlen % 128 == 0:
            tq = 128
        else:
            tq = qlen
    assert qlen % tq == 0
    n_qt = qlen // tq

    wq, bq, wk, bk, wv, bv, wo, bo = params
    out_dtype = x.dtype
    cdt = jnp.dtype(compute_dtype)
    itm = cdt.itemsize

    # Fold the 1/sqrt(dph) scale into the Q projection (zero kernel cost) and
    # cast all MXU operands to the compute dtype explicitly.
    scale = 1.0 / math.sqrt(dph)
    wq = (wq * scale).astype(cdt)
    bq = bq * scale
    wk = wk.astype(cdt)
    wv = wv.astype(cdt)
    wo = wo.astype(cdt)
    x_c = x.astype(cdt)

    # Biases as (1, dim) f32 (added to f32 accumulators).
    bq2, bk2, bv2, bo2 = (b.reshape(1, dim).astype(jnp.float32)
                          for b in (bq, bk, bv, bo))

    # Additive mask bias: 0 keep / -1e30 masked (finite -> no NaN on all-masked
    # rows; PyTorch reference would produce NaN there).
    bias = jnp.where(mask == 0, -1e30, 0.0).astype(jnp.float32).reshape(bs, 1, klen)

    # Exact reciprocal when running a full-f32 parity configuration.
    approx_recip = bool(cdt != jnp.dtype(jnp.float32))
    kernel = functools.partial(_mha_kernel, n_heads=n_heads, dim_per_head=dph,
                               approx_recip=approx_recip)

    # Constant-index blocks: single-buffered (double-buffering buys nothing and
    # doubles their VMEM footprint).
    w_spec = pl.BlockSpec((dim, dim), lambda b, q: (0, 0),
                          pipeline_mode=pl.Buffered(1))
    b_spec = pl.BlockSpec((1, dim), lambda b, q: (0, 0),
                          pipeline_mode=pl.Buffered(1))

    # ---- VMEM budget derived from the actual buffers (lane padding included
    #      for the dph-minor scratches), capped by physical VMEM.
    out_itm = jnp.dtype(out_dtype).itemsize
    dph_pad = -(-dph // 128) * 128
    need = 0
    need += 4 * dim * dim * itm + 4 * dim * 4          # weights/biases (x1 buffer)
    need += 2 * tq * dim * itm                         # x query tile (x2 buffers)
    need += 2 * qlen * dim * itm                       # x_kv full block (x2 buffers)
    need += 2 * max(klen, 128) * 4                     # mask bias
    need += 2 * tq * dim * out_itm                     # output tile (x2 buffers)
    need += 2 * n_heads * qlen * dph_pad * itm         # k_scr + v_scr
    need += n_heads * tq * dph_pad * itm               # q_scr
    need += tq * dim * itm                             # ctx_scr
    need += 2 * n_heads * tq * klen * 4                # f32 scores / exp
    need += 2 * qlen * dim * 4 + 2 * tq * dim * 4      # f32 projection temps
    try:
        phys = int(pltpu.get_tpu_info().vmem_capacity_bytes)
    except Exception:
        phys = 64 * 1024 * 1024                        # conservative (v7x per-TC)
    vmem_limit = int(min(phys * 7 // 8,
                         max(32 * 1024 * 1024, int(need * 1.5))))

    # ---- Advisory cost estimate for the XLA scheduler.
    flops = 8 * bs * qlen * dim * dim + 4 * bs * qlen * klen * dim
    cost = pl.CostEstimate(
        flops=int(flops),
        transcendentals=int(bs * n_heads * qlen * klen),
        bytes_accessed=int(2 * bs * qlen * dim * itm      # x streamed twice
                           + bs * qlen * dim * out_itm    # output
                           + 4 * dim * dim * itm + 4 * dim * 4
                           + bs * klen * 4))
    # TODO(synk): avoid streaming x twice (separate K/V projection pass) when
    #             the kernel is HBM-bound at long sequence lengths.

    return pl.pallas_call(
        kernel,
        out_shape=jax.ShapeDtypeStruct((bs, qlen, dim), out_dtype),
        grid_spec=pltpu.PrefetchScalarGridSpec(
            num_scalar_prefetch=0,
            grid=(bs, n_qt),
            in_specs=[
                pl.BlockSpec((1, tq, dim), lambda b, q: (b, q, 0)),    # x (query tile)
                pl.BlockSpec((1, qlen, dim), lambda b, q: (b, 0, 0)),  # x (full, for K/V)
                pl.BlockSpec((1, 1, klen), lambda b, q: (b, 0, 0)),    # mask bias
                w_spec, b_spec,                                        # q_lin
                w_spec, b_spec,                                        # k_lin
                w_spec, b_spec,                                        # v_lin
                w_spec, b_spec,                                        # out_lin
            ],
            out_specs=pl.BlockSpec((1, tq, dim), lambda b, q: (b, q, 0)),
            scratch_shapes=[
                pltpu.VMEM((n_heads, qlen, dph), cdt),   # K (head-major)
                pltpu.VMEM((n_heads, qlen, dph), cdt),   # V (head-major)
                pltpu.VMEM((n_heads, tq, dph), cdt),     # Q (head-major, per tile)
                pltpu.VMEM((tq, dim), cdt),              # context (flat, per tile)
            ],
        ),
        compiler_params=pltpu.CompilerParams(
            dimension_semantics=("parallel", "arbitrary"),
            vmem_limit_bytes=vmem_limit),
        cost_estimate=cost,
    )(x_c, x_c, bias, wq, bq2, wk, bk2, wv, bv2, wo, bo2)


def _reference_mha(x, mask, params, n_heads):
    """Pure-JAX reference mirroring the PyTorch forward (kv=None, cache=None, eval)."""
    bs, qlen, dim = x.shape
    dph = dim // n_heads
    wq, bq, wk, bk, wv, bv, wo, bo = params

    def shape(t):
        return t.reshape(bs, qlen, n_heads, dph).transpose(0, 2, 1, 3)

    q = shape(x @ wq + bq) / math.sqrt(dph)
    k = shape(x @ wk + bk)
    v = shape(x @ wv + bv)
    scores = jnp.einsum("bhqd,bhkd->bhqk", q, k)
    m = (mask == 0).reshape(bs, 1, 1, -1)
    scores = jnp.where(m, -jnp.inf, scores)
    weights = jax.nn.softmax(scores.astype(jnp.float32), axis=-1)
    ctx = jnp.einsum("bhqk,bhkd->bhqd", weights, v)
    ctx = ctx.transpose(0, 2, 1, 3).reshape(bs, qlen, dim)
    return ctx @ wo + bo


def _init_linear_params(key, in_f, out_f):
    """Deterministic nn.Linear-style init; weight returned as (in, out)."""
    kw, kb = jax.random.split(key)
    bound = 1.0 / math.sqrt(in_f)
    w = jax.random.uniform(kw, (in_f, out_f), jnp.float32, -bound, bound)
    b = jax.random.uniform(kb, (out_f,), jnp.float32, -bound, bound)
    return w, b


if __name__ == "__main__":
    # dim=128 keeps the output lane-dense (multiple of 128); qlen=16 with tq=8
    # exercises the q-tile grid axis and the K/V scratch reuse across tiles.
    bs, qlen, dim, n_heads = 2, 16, 128, 4

    key = jax.random.PRNGKey(0)
    kx, kq, kk, kv, ko = jax.random.split(key, 5)

    x = jax.random.normal(kx, (bs, qlen, dim), jnp.float32)

    # mask: (bs, klen), 1 = attend, 0 = masked (at least one valid key per row)
    mask = jnp.ones((bs, qlen), jnp.float32)
    mask = mask.at[1, -3:].set(0.0)

    wq, bq = _init_linear_params(kq, dim, dim)
    wk, bk = _init_linear_params(kk, dim, dim)
    wv, bv = _init_linear_params(kv, dim, dim)
    wo, bo = _init_linear_params(ko, dim, dim)
    params = (wq, bq, wk, bk, wv, bv, wo, bo)

    ref = _reference_mha(x, mask, params, n_heads)

    # Fast path: bf16 operands, f32 accumulation (default).
    out_bf16 = multi_head_attention(x, mask, params, n_heads, tq=8)
    out_bf16 = jax.block_until_ready(out_bf16)
    assert out_bf16.shape == ref.shape
    assert jnp.allclose(out_bf16, ref, atol=3e-2, rtol=3e-2), "bf16 path mismatch"

    # Parity path: full f32 compute, exact reciprocal, tight tolerance.
    out_f32 = multi_head_attention(x, mask, params, n_heads, tq=8,
                                   compute_dtype=jnp.float32)
    out_f32 = jax.block_until_ready(out_f32)
    assert jnp.allclose(out_f32, ref, atol=1e-3, rtol=1e-3), "f32 path mismatch"

    print("KERNEL_OK")
</pallas_src>

<mosaic_0001>
module attributes {stable_mosaic.version = 11 : i64} {
  func.func @_mha_kernel(%arg0: i32, %arg1: i32, %arg2: memref<1x8x128xbf16, #tpu.memory_space<vmem>>, %arg3: memref<1x16x128xbf16, #tpu.memory_space<vmem>>, %arg4: memref<1x1x16xf32, #tpu.memory_space<vmem>>, %arg5: memref<128x128xbf16, #tpu.memory_space<vmem>>, %arg6: memref<1x128xf32, #tpu.memory_space<vmem>>, %arg7: memref<128x128xbf16, #tpu.memory_space<vmem>>, %arg8: memref<1x128xf32, #tpu.memory_space<vmem>>, %arg9: memref<128x128xbf16, #tpu.memory_space<vmem>>, %arg10: memref<1x128xf32, #tpu.memory_space<vmem>>, %arg11: memref<128x128xbf16, #tpu.memory_space<vmem>>, %arg12: memref<1x128xf32, #tpu.memory_space<vmem>>, %arg13: memref<1x8x128xf32, #tpu.memory_space<vmem>>, %arg14: memref<4x16x32xbf16, #tpu.memory_space<vmem>>, %arg15: memref<4x16x32xbf16, #tpu.memory_space<vmem>>, %arg16: memref<4x8x32xbf16, #tpu.memory_space<vmem>>, %arg17: memref<8x128xbf16, #tpu.memory_space<vmem>>) attributes {dimension_semantics = [#tpu.dimension_semantics<parallel>, #tpu.dimension_semantics<arbitrary>], iteration_bounds = array<i64: 2, 2>, scalar_prefetch = 0 : i64, scratch_operands = 4 : i64, tpu.core_type = #tpu.core_type<tc>, window_params = [{transform_indices = @transform_0, window_bounds = array<i64: 1, 8, 128>}, {transform_indices = @transform_1, window_bounds = array<i64: 1, 16, 128>}, {transform_indices = @transform_2, window_bounds = array<i64: 1, 1, 16>}, {pipeline_mode = #tpu.pipeline_mode<synchronous>, transform_indices = @transform_3, window_bounds = array<i64: 128, 128>}, {pipeline_mode = #tpu.pipeline_mode<synchronous>, transform_indices = @transform_4, window_bounds = array<i64: 1, 128>}, {pipeline_mode = #tpu.pipeline_mode<synchronous>, transform_indices = @transform_5, window_bounds = array<i64: 128, 128>}, {pipeline_mode = #tpu.pipeline_mode<synchronous>, transform_indices = @transform_6, window_bounds = array<i64: 1, 128>}, {pipeline_mode = #tpu.pipeline_mode<synchronous>, transform_indices = @transform_7, window_bounds = array<i64: 128, 128>}, {pipeline_mode = #tpu.pipeline_mode<synchronous>, transform_indices = @transform_8, window_bounds = array<i64: 1, 128>}, {pipeline_mode = #tpu.pipeline_mode<synchronous>, transform_indices = @transform_9, window_bounds = array<i64: 128, 128>}, {pipeline_mode = #tpu.pipeline_mode<synchronous>, transform_indices = @transform_10, window_bounds = array<i64: 1, 128>}, {transform_indices = @transform_11, window_bounds = array<i64: 1, 8, 128>}]} {
    %c0_i32 = arith.constant 0 : i32
    %0 = arith.cmpi eq, %arg1, %c0_i32 : i32
    %1 = arith.extui %0 : i1 to i32
    %c0_i32_0 = arith.constant 0 : i32
    %2 = arith.cmpi ne, %1, %c0_i32_0 : i32
    scf.if %2 {
      %c0_47 = arith.constant 0 : index
      %c0_48 = arith.constant 0 : index
      %c0_49 = arith.constant 0 : index
      %77 = vector.load %arg3[%c0_47, %c0_48, %c0_49] : memref<1x16x128xbf16, #tpu.memory_space<vmem>>, vector<1x16x128xbf16>
      %78 = vector.shape_cast %77 : vector<1x16x128xbf16> to vector<16x128xbf16>
      %c0_50 = arith.constant 0 : index
      %c0_51 = arith.constant 0 : index
      %79 = vector.load %arg7[%c0_50, %c0_51] : memref<128x128xbf16, #tpu.memory_space<vmem>>, vector<128x128xbf16>
      %cst_52 = arith.constant dense<0.000000e+00> : vector<16x128xf32>
      %80 = tpu.matmul %78, %79, %cst_52 {dimension_numbers = #tpu.dot_dimension_numbers<[1], [0], [0], [1], [0, 0, 1, 1], [], []>} : vector<16x128xbf16>, vector<128x128xbf16>, vector<16x128xf32> -> vector<16x128xf32>
      %c0_53 = arith.constant 0 : index
      %c0_54 = arith.constant 0 : index
      %81 = vector.load %arg8[%c0_53, %c0_54] : memref<1x128xf32, #tpu.memory_space<vmem>>, vector<1x128xf32>
      %82 = vector.shape_cast %81 : vector<1x128xf32> to vector<128xf32>
      %83 = vector.shape_cast %82 : vector<128xf32> to vector<1x128xf32>
      %84 = vector.broadcast %83 : vector<1x128xf32> to vector<16x128xf32>
      %85 = arith.addf %80, %84 : vector<16x128xf32>
      %c0_55 = arith.constant 0 : index
      %c0_56 = arith.constant 0 : index
      %86 = vector.load %arg9[%c0_55, %c0_56] : memref<128x128xbf16, #tpu.memory_space<vmem>>, vector<128x128xbf16>
      %cst_57 = arith.constant dense<0.000000e+00> : vector<16x128xf32>
      %87 = tpu.matmul %78, %86, %cst_57 {dimension_numbers = #tpu.dot_dimension_numbers<[1], [0], [0], [1], [0, 0, 1, 1], [], []>} : vector<16x128xbf16>, vector<128x128xbf16>, vector<16x128xf32> -> vector<16x128xf32>
      %c0_58 = arith.constant 0 : index
      %c0_59 = arith.constant 0 : index
      %88 = vector.load %arg10[%c0_58, %c0_59] : memref<1x128xf32, #tpu.memory_space<vmem>>, vector<1x128xf32>
      %89 = vector.shape_cast %88 : vector<1x128xf32> to vector<128xf32>
      %90 = vector.shape_cast %89 : vector<128xf32> to vector<1x128xf32>
      %91 = vector.broadcast %90 : vector<1x128xf32> to vector<16x128xf32>
      %92 = arith.addf %87, %91 : vector<16x128xf32>
      %93 = arith.truncf %85 : vector<16x128xf32> to vector<16x128xbf16>
      %94 = arith.truncf %92 : vector<16x128xf32> to vector<16x128xbf16>
      %95 = vector.extract_strided_slice %93 {offsets = [0, 0], sizes = [16, 32], strides = [1, 1]} : vector<16x128xbf16> to vector<16x32xbf16>
      %c0_60 = arith.constant 0 : index
      %c0_61 = arith.constant 0 : index
      %c0_62 = arith.constant 0 : index
      %96 = vector.load %arg14[%c0_60, %c0_61, %c0_62] : memref<4x16x32xbf16, #tpu.memory_space<vmem>>, vector<1x16x32xbf16>
      %97 = vector.shape_cast %96 : vector<1x16x32xbf16> to vector<16x32xbf16>
      %98 = vector.shape_cast %95 : vector<16x32xbf16> to vector<1x16x32xbf16>
      tpu.vector_store %arg14[%c0_60, %c0_61, %c0_62], %98 {strides = array<i32>} : memref<4x16x32xbf16, #tpu.memory_space<vmem>>, vector<1x16x32xbf16>,
      %99 = vector.extract_strided_slice %94 {offsets = [0, 0], sizes = [16, 32], strides = [1, 1]} : vector<16x128xbf16> to vector<16x32xbf16>
      %c0_63 = arith.constant 0 : index
      %c0_64 = arith.constant 0 : index
      %c0_65 = arith.constant 0 : index
      %100 = vector.load %arg15[%c0_63, %c0_64, %c0_65] : memref<4x16x32xbf16, #tpu.memory_space<vmem>>, vector<1x16x32xbf16>
      %101 = vector.shape_cast %100 : vector<1x16x32xbf16> to vector<16x32xbf16>
      %102 = vector.shape_cast %99 : vector<16x32xbf16> to vector<1x16x32xbf16>
      tpu.vector_store %arg15[%c0_63, %c0_64, %c0_65], %102 {strides = array<i32>} : memref<4x16x32xbf16, #tpu.memory_space<vmem>>, vector<1x16x32xbf16>,
      %103 = vector.extract_strided_slice %93 {offsets = [0, 32], sizes = [16, 32], strides = [1, 1]} : vector<16x128xbf16> to vector<16x32xbf16>
      %c1_66 = arith.constant 1 : index
      %c0_67 = arith.constant 0 : index
      %c0_68 = arith.constant 0 : index
      %104 = vector.load %arg14[%c1_66, %c0_67, %c0_68] : memref<4x16x32xbf16, #tpu.memory_space<vmem>>, vector<1x16x32xbf16>
      %105 = vector.shape_cast %104 : vector<1x16x32xbf16> to vector<16x32xbf16>
      %106 = vector.shape_cast %103 : vector<16x32xbf16> to vector<1x16x32xbf16>
      tpu.vector_store %arg14[%c1_66, %c0_67, %c0_68], %106 {strides = array<i32>} : memref<4x16x32xbf16, #tpu.memory_space<vmem>>, vector<1x16x32xbf16>,
      %107 = vector.extract_strided_slice %94 {offsets = [0, 32], sizes = [16, 32], strides = [1, 1]} : vector<16x128xbf16> to vector<16x32xbf16>
      %c1_69 = arith.constant 1 : index
      %c0_70 = arith.constant 0 : index
      %c0_71 = arith.constant 0 : index
      %108 = vector.load %arg15[%c1_69, %c0_70, %c0_71] : memref<4x16x32xbf16, #tpu.memory_space<vmem>>, vector<1x16x32xbf16>
      %109 = vector.shape_cast %108 : vector<1x16x32xbf16> to vector<16x32xbf16>
      %110 = vector.shape_cast %107 : vector<16x32xbf16> to vector<1x16x32xbf16>
      tpu.vector_store %arg15[%c1_69, %c0_70, %c0_71], %110 {strides = array<i32>} : memref<4x16x32xbf16, #tpu.memory_space<vmem>>, vector<1x16x32xbf16>,
      %111 = vector.extract_strided_slice %93 {offsets = [0, 64], sizes = [16, 32], strides = [1, 1]} : vector<16x128xbf16> to vector<16x32xbf16>
      %c2_72 = arith.constant 2 : index
      %c0_73 = arith.constant 0 : index
      %c0_74 = arith.constant 0 : index
      %112 = vector.load %arg14[%c2_72, %c0_73, %c0_74] : memref<4x16x32xbf16, #tpu.memory_space<vmem>>, vector<1x16x32xbf16>
      %113 = vector.shape_cast %112 : vector<1x16x32xbf16> to vector<16x32xbf16>
      %114 = vector.shape_cast %111 : vector<16x32xbf16> to vector<1x16x32xbf16>
      tpu.vector_store %arg14[%c2_72, %c0_73, %c0_74], %114 {strides = array<i32>} : memref<4x16x32xbf16, #tpu.memory_space<vmem>>, vector<1x16x32xbf16>,
      %115 = vector.extract_strided_slice %94 {offsets = [0, 64], sizes = [16, 32], strides = [1, 1]} : vector<16x128xbf16> to vector<16x32xbf16>
      %c2_75 = arith.constant 2 : index
      %c0_76 = arith.constant 0 : index
      %c0_77 = arith.constant 0 : index
      %116 = vector.load %arg15[%c2_75, %c0_76, %c0_77] : memref<4x16x32xbf16, #tpu.memory_space<vmem>>, vector<1x16x32xbf16>
      %117 = vector.shape_cast %116 : vector<1x16x32xbf16> to vector<16x32xbf16>
      %118 = vector.shape_cast %115 : vector<16x32xbf16> to vector<1x16x32xbf16>
      tpu.vector_store %arg15[%c2_75, %c0_76, %c0_77], %118 {strides = array<i32>} : memref<4x16x32xbf16, #tpu.memory_space<vmem>>, vector<1x16x32xbf16>,
      %119 = vector.extract_strided_slice %93 {offsets = [0, 96], sizes = [16, 32], strides = [1, 1]} : vector<16x128xbf16> to vector<16x32xbf16>
      %c3_78 = arith.constant 3 : index
      %c0_79 = arith.constant 0 : index
      %c0_80 = arith.constant 0 : index
      %120 = vector.load %arg14[%c3_78, %c0_79, %c0_80] : memref<4x16x32xbf16, #tpu.memory_space<vmem>>, vector<1x16x32xbf16>
      %121 = vector.shape_cast %120 : vector<1x16x32xbf16> to vector<16x32xbf16>
      %122 = vector.shape_cast %119 : vector<16x32xbf16> to vector<1x16x32xbf16>
      tpu.vector_store %arg14[%c3_78, %c0_79, %c0_80], %122 {strides = array<i32>} : memref<4x16x32xbf16, #tpu.memory_space<vmem>>, vector<1x16x32xbf16>,
      %123 = vector.extract_strided_slice %94 {offsets = [0, 96], sizes = [16, 32], strides = [1, 1]} : vector<16x128xbf16> to vector<16x32xbf16>
      %c3_81 = arith.constant 3 : index
      %c0_82 = arith.constant 0 : index
      %c0_83 = arith.constant 0 : index
      %124 = vector.load %arg15[%c3_81, %c0_82, %c0_83] : memref<4x16x32xbf16, #tpu.memory_space<vmem>>, vector<1x16x32xbf16>
      %125 = vector.shape_cast %124 : vector<1x16x32xbf16> to vector<16x32xbf16>
      %126 = vector.shape_cast %123 : vector<16x32xbf16> to vector<1x16x32xbf16>
      tpu.vector_store %arg15[%c3_81, %c0_82, %c0_83], %126 {strides = array<i32>} : memref<4x16x32xbf16, #tpu.memory_space<vmem>>, vector<1x16x32xbf16>,
    } else {
    }
    %c0 = arith.constant 0 : index
    %c0_1 = arith.constant 0 : index
    %c0_2 = arith.constant 0 : index
    %3 = vector.load %arg2[%c0, %c0_1, %c0_2] : memref<1x8x128xbf16, #tpu.memory_space<vmem>>, vector<1x8x128xbf16>
    %4 = vector.shape_cast %3 : vector<1x8x128xbf16> to vector<8x128xbf16>
    %c0_3 = arith.constant 0 : index
    %c0_4 = arith.constant 0 : index
    %5 = vector.load %arg5[%c0_3, %c0_4] : memref<128x128xbf16, #tpu.memory_space<vmem>>, vector<128x128xbf16>
    %cst = arith.constant dense<0.000000e+00> : vector<8x128xf32>
    %6 = tpu.matmul %4, %5, %cst {dimension_numbers = #tpu.dot_dimension_numbers<[1], [0], [0], [1], [0, 0, 1, 1], [], []>} : vector<8x128xbf16>, vector<128x128xbf16>, vector<8x128xf32> -> vector<8x128xf32>
    %c0_5 = arith.constant 0 : index
    %c0_6 = arith.constant 0 : index
    %7 = vector.load %arg6[%c0_5, %c0_6] : memref<1x128xf32, #tpu.memory_space<vmem>>, vector<1x128xf32>
    %8 = vector.shape_cast %7 : vector<1x128xf32> to vector<128xf32>
    %9 = vector.shape_cast %8 : vector<128xf32> to vector<1x128xf32>
    %10 = vector.broadcast %9 : vector<1x128xf32> to vector<8x128xf32>
    %11 = arith.addf %6, %10 : vector<8x128xf32>
    %12 = arith.truncf %11 : vector<8x128xf32> to vector<8x128xbf16>
    %13 = vector.extract_strided_slice %12 {offsets = [0, 0], sizes = [8, 32], strides = [1, 1]} : vector<8x128xbf16> to vector<8x32xbf16>
    %c0_7 = arith.constant 0 : index
    %c0_8 = arith.constant 0 : index
    %c0_9 = arith.constant 0 : index
    %14 = vector.load %arg16[%c0_7, %c0_8, %c0_9] : memref<4x8x32xbf16, #tpu.memory_space<vmem>>, vector<1x8x32xbf16>
    %15 = vector.shape_cast %14 : vector<1x8x32xbf16> to vector<8x32xbf16>
    %16 = vector.shape_cast %13 : vector<8x32xbf16> to vector<1x8x32xbf16>
    tpu.vector_store %arg16[%c0_7, %c0_8, %c0_9], %16 {strides = array<i32>} : memref<4x8x32xbf16, #tpu.memory_space<vmem>>, vector<1x8x32xbf16>,
    %17 = vector.extract_strided_slice %12 {offsets = [0, 32], sizes = [8, 32], strides = [1, 1]} : vector<8x128xbf16> to vector<8x32xbf16>
    %c1 = arith.constant 1 : index
    %c0_10 = arith.constant 0 : index
    %c0_11 = arith.constant 0 : index
    %18 = vector.load %arg16[%c1, %c0_10, %c0_11] : memref<4x8x32xbf16, #tpu.memory_space<vmem>>, vector<1x8x32xbf16>
    %19 = vector.shape_cast %18 : vector<1x8x32xbf16> to vector<8x32xbf16>
    %20 = vector.shape_cast %17 : vector<8x32xbf16> to vector<1x8x32xbf16>
    tpu.vector_store %arg16[%c1, %c0_10, %c0_11], %20 {strides = array<i32>} : memref<4x8x32xbf16, #tpu.memory_space<vmem>>, vector<1x8x32xbf16>,
    %21 = vector.extract_strided_slice %12 {offsets = [0, 64], sizes = [8, 32], strides = [1, 1]} : vector<8x128xbf16> to vector<8x32xbf16>
    %c2 = arith.constant 2 : index
    %c0_12 = arith.constant 0 : index
    %c0_13 = arith.constant 0 : index
    %22 = vector.load %arg16[%c2, %c0_12, %c0_13] : memref<4x8x32xbf16, #tpu.memory_space<vmem>>, vector<1x8x32xbf16>
    %23 = vector.shape_cast %22 : vector<1x8x32xbf16> to vector<8x32xbf16>
    %24 = vector.shape_cast %21 : vector<8x32xbf16> to vector<1x8x32xbf16>
    tpu.vector_store %arg16[%c2, %c0_12, %c0_13], %24 {strides = array<i32>} : memref<4x8x32xbf16, #tpu.memory_space<vmem>>, vector<1x8x32xbf16>,
    %25 = vector.extract_strided_slice %12 {offsets = [0, 96], sizes = [8, 32], strides = [1, 1]} : vector<8x128xbf16> to vector<8x32xbf16>
    %c3 = arith.constant 3 : index
    %c0_14 = arith.constant 0 : index
    %c0_15 = arith.constant 0 : index
    %26 = vector.load %arg16[%c3, %c0_14, %c0_15] : memref<4x8x32xbf16, #tpu.memory_space<vmem>>, vector<1x8x32xbf16>
    %27 = vector.shape_cast %26 : vector<1x8x32xbf16> to vector<8x32xbf16>
    %28 = vector.shape_cast %25 : vector<8x32xbf16> to vector<1x8x32xbf16>
    tpu.vector_store %arg16[%c3, %c0_14, %c0_15], %28 {strides = array<i32>} : memref<4x8x32xbf16, #tpu.memory_space<vmem>>, vector<1x8x32xbf16>,
    %c0_16 = arith.constant 0 : index
    %c0_17 = arith.constant 0 : index
    %c0_18 = arith.constant 0 : index
    %29 = vector.load %arg16[%c0_16, %c0_17, %c0_18] : memref<4x8x32xbf16, #tpu.memory_space<vmem>>, vector<4x8x32xbf16>
    %c0_19 = arith.constant 0 : index
    %c0_20 = arith.constant 0 : index
    %c0_21 = arith.constant 0 : index
    %30 = vector.load %arg14[%c0_19, %c0_20, %c0_21] : memref<4x16x32xbf16, #tpu.memory_space<vmem>>, vector<4x16x32xbf16>
    %c0_22 = arith.constant 0 : index
    %c0_23 = arith.constant 0 : index
    %c0_24 = arith.constant 0 : index
    %31 = vector.load %arg15[%c0_22, %c0_23, %c0_24] : memref<4x16x32xbf16, #tpu.memory_space<vmem>>, vector<4x16x32xbf16>
    "tpu.trace_start"() <{level = 10 : i32, message = "hqd,hkd->hqk"}> : () -> ()
    %cst_25 = arith.constant dense<0.000000e+00> : vector<4x8x16xf32>
    %32 = tpu.matmul %29, %30, %cst_25 {dimension_numbers = #tpu.dot_dimension_numbers<[2], [2], [1], [1], [0, 0, 0, 1, 1, 1], [0], [0]>} : vector<4x8x32xbf16>, vector<4x16x32xbf16>, vector<4x8x16xf32> -> vector<4x8x16xf32>
    "tpu.trace_stop"() : () -> ()
    %c0_26 = arith.constant 0 : index
    %c0_27 = arith.constant 0 : index
    %c0_28 = arith.constant 0 : index
    %33 = vector.load %arg4[%c0_26, %c0_27, %c0_28] : memref<1x1x16xf32, #tpu.memory_space<vmem>>, vector<1x1x16xf32>
    %34 = vector.shape_cast %33 : vector<1x1x16xf32> to vector<1x16xf32>
    %35 = vector.shape_cast %34 : vector<1x16xf32> to vector<1x1x16xf32>
    %36 = vector.broadcast %35 : vector<1x1x16xf32> to vector<4x8x16xf32>
    %37 = arith.addf %32, %36 : vector<4x8x16xf32>
    %cst_29 = arith.constant dense<0xFF800000> : vector<4x8xf32>
    %38 = vector.multi_reduction <maximumf>, %37, %cst_29 [2] : vector<4x8x16xf32> to vector<4x8xf32>
    %39 = vector.shape_cast %38 : vector<4x8xf32> to vector<4x8x1xf32>
    %40 = vector.broadcast %39 : vector<4x8x1xf32> to vector<4x8x16xf32>
    %41 = arith.subf %37, %40 : vector<4x8x16xf32>
    %42 = math.exp %41 : vector<4x8x16xf32>
    %cst_30 = arith.constant dense<0.000000e+00> : vector<4x8xf32>
    %43 = vector.multi_reduction <add>, %42, %cst_30 [2] : vector<4x8x16xf32> to vector<4x8xf32>
    %44 = vector.shape_cast %43 : vector<4x8xf32> to vector<4x8x1xf32>
    %45 = arith.truncf %42 : vector<4x8x16xf32> to vector<4x8x16xbf16>
    "tpu.trace_start"() <{level = 10 : i32, message = "hqk,hkd->hqd"}> : () -> ()
    %cst_31 = arith.constant dense<0.000000e+00> : vector<4x8x32xf32>
    %46 = tpu.matmul %45, %31, %cst_31 {dimension_numbers = #tpu.dot_dimension_numbers<[2], [1], [1], [2], [0, 0, 0, 1, 1, 2], [0], [0]>} : vector<4x8x16xbf16>, vector<4x16x32xbf16>, vector<4x8x32xf32> -> vector<4x8x32xf32>
    "tpu.trace_stop"() : () -> ()
    %47 = tpu.reciprocal %44 {approx = true} : vector<4x8x1xf32> -> vector<4x8x1xf32>
    %48 = vector.broadcast %47 : vector<4x8x1xf32> to vector<4x8x32xf32>
    %49 = arith.mulf %46, %48 : vector<4x8x32xf32>
    %50 = vector.extract_strided_slice %49 {offsets = [0, 0, 0], sizes = [1, 8, 32], strides = [1, 1, 1]} : vector<4x8x32xf32> to vector<1x8x32xf32>
    %51 = vector.shape_cast %50 : vector<1x8x32xf32> to vector<8x32xf32>
    %52 = arith.truncf %51 : vector<8x32xf32> to vector<8x32xbf16>
    %c0_32 = arith.constant 0 : index
    %c0_33 = arith.constant 0 : index
    %53 = vector.load %arg17[%c0_32, %c0_33] : memref<8x128xbf16, #tpu.memory_space<vmem>>, vector<8x32xbf16>
    tpu.vector_store %arg17[%c0_32, %c0_33], %52 {strides = array<i32>} : memref<8x128xbf16, #tpu.memory_space<vmem>>, vector<8x32xbf16>,
    %54 = vector.extract_strided_slice %49 {offsets = [1, 0, 0], sizes = [1, 8, 32], strides = [1, 1, 1]} : vector<4x8x32xf32> to vector<1x8x32xf32>
    %55 = vector.shape_cast %54 : vector<1x8x32xf32> to vector<8x32xf32>
    %56 = arith.truncf %55 : vector<8x32xf32> to vector<8x32xbf16>
    %c0_34 = arith.constant 0 : index
    %c32 = arith.constant 32 : index
    %57 = vector.load %arg17[%c0_34, %c32] : memref<8x128xbf16, #tpu.memory_space<vmem>>, vector<8x32xbf16>
    tpu.vector_store %arg17[%c0_34, %c32], %56 {strides = array<i32>} : memref<8x128xbf16, #tpu.memory_space<vmem>>, vector<8x32xbf16>,
    %58 = vector.extract_strided_slice %49 {offsets = [2, 0, 0], sizes = [1, 8, 32], strides = [1, 1, 1]} : vector<4x8x32xf32> to vector<1x8x32xf32>
    %59 = vector.shape_cast %58 : vector<1x8x32xf32> to vector<8x32xf32>
    %60 = arith.truncf %59 : vector<8x32xf32> to vector<8x32xbf16>
    %c0_35 = arith.constant 0 : index
    %c64 = arith.constant 64 : index
    %61 = vector.load %arg17[%c0_35, %c64] : memref<8x128xbf16, #tpu.memory_space<vmem>>, vector<8x32xbf16>
    tpu.vector_store %arg17[%c0_35, %c64], %60 {strides = array<i32>} : memref<8x128xbf16, #tpu.memory_space<vmem>>, vector<8x32xbf16>,
    %62 = vector.extract_strided_slice %49 {offsets = [3, 0, 0], sizes = [1, 8, 32], strides = [1, 1, 1]} : vector<4x8x32xf32> to vector<1x8x32xf32>
    %63 = vector.shape_cast %62 : vector<1x8x32xf32> to vector<8x32xf32>
    %64 = arith.truncf %63 : vector<8x32xf32> to vector<8x32xbf16>
    %c0_36 = arith.constant 0 : index
    %c96 = arith.constant 96 : index
    %65 = vector.load %arg17[%c0_36, %c96] : memref<8x128xbf16, #tpu.memory_space<vmem>>, vector<8x32xbf16>
    tpu.vector_store %arg17[%c0_36, %c96], %64 {strides = array<i32>} : memref<8x128xbf16, #tpu.memory_space<vmem>>, vector<8x32xbf16>,
    %c0_37 = arith.constant 0 : index
    %c0_38 = arith.constant 0 : index
    %66 = vector.load %arg17[%c0_37, %c0_38] : memref<8x128xbf16, #tpu.memory_space<vmem>>, vector<8x128xbf16>
    %c0_39 = arith.constant 0 : index
    %c0_40 = arith.constant 0 : index
    %67 = vector.load %arg11[%c0_39, %c0_40] : memref<128x128xbf16, #tpu.memory_space<vmem>>, vector<128x128xbf16>
    %cst_41 = arith.constant dense<0.000000e+00> : vector<8x128xf32>
    %68 = tpu.matmul %66, %67, %cst_41 {dimension_numbers = #tpu.dot_dimension_numbers<[1], [0], [0], [1], [0, 0, 1, 1], [], []>} : vector<8x128xbf16>, vector<128x128xbf16>, vector<8x128xf32> -> vector<8x128xf32>
    %c0_42 = arith.constant 0 : index
    %c0_43 = arith.constant 0 : index
    %69 = vector.load %arg12[%c0_42, %c0_43] : memref<1x128xf32, #tpu.memory_space<vmem>>, vector<1x128xf32>
    %70 = vector.shape_cast %69 : vector<1x128xf32> to vector<128xf32>
    %71 = vector.shape_cast %70 : vector<128xf32> to vector<1x128xf32>
    %72 = vector.broadcast %71 : vector<1x128xf32> to vector<8x128xf32>
    %73 = arith.addf %68, %72 : vector<8x128xf32>
    %c0_44 = arith.constant 0 : index
    %c0_45 = arith.constant 0 : index
    %c0_46 = arith.constant 0 : index
    %74 = vector.load %arg13[%c0_44, %c0_45, %c0_46] : memref<1x8x128xf32, #tpu.memory_space<vmem>>, vector<1x8x128xf32>
    %75 = vector.shape_cast %74 : vector<1x8x128xf32> to vector<8x128xf32>
    %76 = vector.shape_cast %73 : vector<8x128xf32> to vector<1x8x128xf32>
    tpu.vector_store %arg13[%c0_44, %c0_45, %c0_46], %76 {strides = array<i32>} : memref<1x8x128xf32, #tpu.memory_space<vmem>>, vector<1x8x128xf32>,
    return
  }
  func.func @transform_0(%arg0: i32, %arg1: i32) -> (i32, i32, i32) {
    %c0_i32 = arith.constant 0 : i32
    %c0_i32_0 = arith.constant 0 : i32
    return %arg0, %arg1, %c0_i32 : i32, i32, i32
  }
  func.func @transform_1(%arg0: i32, %arg1: i32) -> (i32, i32, i32) {
    %c0_i32 = arith.constant 0 : i32
    %c0_i32_0 = arith.constant 0 : i32
    %c0_i32_1 = arith.constant 0 : i32
    return %arg0, %c0_i32, %c0_i32_0 : i32, i32, i32
  }
  func.func @transform_2(%arg0: i32, %arg1: i32) -> (i32, i32, i32) {
    %c0_i32 = arith.constant 0 : i32
    %c0_i32_0 = arith.constant 0 : i32
    %c0_i32_1 = arith.constant 0 : i32
    return %arg0, %c0_i32, %c0_i32_0 : i32, i32, i32
  }
  func.func @transform_3(%arg0: i32, %arg1: i32) -> (i32, i32) {
    %c0_i32 = arith.constant 0 : i32
    %c0_i32_0 = arith.constant 0 : i32
    %c0_i32_1 = arith.constant 0 : i32
    return %c0_i32, %c0_i32_0 : i32, i32
  }
  func.func @transform_4(%arg0: i32, %arg1: i32) -> (i32, i32) {
    %c0_i32 = arith.constant 0 : i32
    %c0_i32_0 = arith.constant 0 : i32
    %c0_i32_1 = arith.constant 0 : i32
    return %c0_i32, %c0_i32_0 : i32, i32
  }
  func.func @transform_5(%arg0: i32, %arg1: i32) -> (i32, i32) {
    %c0_i32 = arith.constant 0 : i32
    %c0_i32_0 = arith.constant 0 : i32
    %c0_i32_1 = arith.constant 0 : i32
    return %c0_i32, %c0_i32_0 : i32, i32
  }
  func.func @transform_6(%arg0: i32, %arg1: i32) -> (i32, i32) {
    %c0_i32 = arith.constant 0 : i32
    %c0_i32_0 = arith.constant 0 : i32
    %c0_i32_1 = arith.constant 0 : i32
    return %c0_i32, %c0_i32_0 : i32, i32
  }
  func.func @transform_7(%arg0: i32, %arg1: i32) -> (i32, i32) {
    %c0_i32 = arith.constant 0 : i32
    %c0_i32_0 = arith.constant 0 : i32
    %c0_i32_1 = arith.constant 0 : i32
    return %c0_i32, %c0_i32_0 : i32, i32
  }
  func.func @transform_8(%arg0: i32, %arg1: i32) -> (i32, i32) {
    %c0_i32 = arith.constant 0 : i32
    %c0_i32_0 = arith.constant 0 : i32
    %c0_i32_1 = arith.constant 0 : i32
    return %c0_i32, %c0_i32_0 : i32, i32
  }
  func.func @transform_9(%arg0: i32, %arg1: i32) -> (i32, i32) {
    %c0_i32 = arith.constant 0 : i32
    %c0_i32_0 = arith.constant 0 : i32
    %c0_i32_1 = arith.constant 0 : i32
    return %c0_i32, %c0_i32_0 : i32, i32
  }
  func.func @transform_10(%arg0: i32, %arg1: i32) -> (i32, i32) {
    %c0_i32 = arith.constant 0 : i32
    %c0_i32_0 = arith.constant 0 : i32
    %c0_i32_1 = arith.constant 0 : i32
    return %c0_i32, %c0_i32_0 : i32, i32
  }
  func.func @transform_11(%arg0: i32, %arg1: i32) -> (i32, i32, i32) {
    %c0_i32 = arith.constant 0 : i32
    %c0_i32_0 = arith.constant 0 : i32
    return %arg0, %arg1, %c0_i32 : i32, i32, i32
  }
}

</mosaic_0001>

<llo_original>
// kernel: tpu_custom_call.1
$region0: #{tpu_custom_call.1}
  #allocation0 [shape = 'u32[]', space=smem, size = 0x4, offset = 0x4, fixed_abs, tag = 'smem constant byte address 0x4 - core index']
  #allocation1 [shape = 'u32[72,128]{1,0:T(1,128)}', space=vmem, size = 0x9000, scoped, tag = 'internal scratch']
  #allocation2 [shape = 'bf16[4,16,32]{2,1,0:T(8,128)(2,1)}', space=vmem, size = 0x4000, scoped, tag = 'scratch operand']
  #allocation3 [shape = 'bf16[4,16,32]{2,1,0:T(8,128)(2,1)}', space=vmem, size = 0x4000, scoped, tag = 'scratch operand']
  #allocation4 [shape = 'bf16[4,8,32]{2,1,0:T(8,128)(2,1)}', space=vmem, size = 0x2000, scoped, tag = 'scratch operand']
  #allocation5 [shape = 'bf16[8,128]{1,0:T(8,128)(2,1)}', space=vmem, size = 0x800, scoped, tag = 'scratch operand']
  %s0 = inlined_call_operand.hbm [shape: bf16[2,16,128], index: 0, kind: input, shape index: {}]
  %s1 = inlined_call_operand.hbm [shape: bf16[2,16,128], index: 1, kind: input, shape index: {}]
  %s2 = inlined_call_operand.hbm [shape: f32[2,1,16], index: 2, kind: input, shape index: {}]
  %s3 = inlined_call_operand.hbm [shape: bf16[128,128], index: 3, kind: input, shape index: {}]
  %s4 = inlined_call_operand.vmem [shape: f32[1,128], index: 4, kind: input, shape index: {}]
  %s5 = inlined_call_operand.hbm [shape: bf16[128,128], index: 5, kind: input, shape index: {}]
  %s6 = inlined_call_operand.vmem [shape: f32[1,128], index: 6, kind: input, shape index: {}]
  %s7 = inlined_call_operand.hbm [shape: bf16[128,128], index: 7, kind: input, shape index: {}]
  %s8 = inlined_call_operand.vmem [shape: f32[1,128], index: 8, kind: input, shape index: {}]
  %s9 = inlined_call_operand.hbm [shape: bf16[128,128], index: 9, kind: input, shape index: {}]
  %s10 = inlined_call_operand.vmem [shape: f32[1,128], index: 10, kind: input, shape index: {}]
  %s11 = inlined_call_operand.hbm [shape: f32[2,16,128], index: 11, kind: output, shape index: {}]
  %s12 = sld [smem:[#allocation0]]
  $region109: #{tpu_custom_call.1} parent=0
    _
  %s14 = ssub.s32 1, %s12
  %s15 = scalar_select 0, %s14, %s12
  $region1: #{tpu_custom_call.1} parent=0
    #allocation6 [shape = 'u8[4096]{0}', space=vmem, size = 0x1000, scoped, tag = 'input window, operand 0']
    #allocation7 [shape = 's32[2]{0}', space=sflag, size = 0x8, scoped, tag = 'scoped memory for tpu_custom_call.1']
    #allocation8 [shape = 's32[2]{0}', space=sflag, size = 0x8, scoped, tag = 'scoped memory for tpu_custom_call.1']
    #allocation9 [shape = 'u8[8192]{0}', space=vmem, size = 0x2000, scoped, tag = 'input window, operand 1']
    #allocation10 [shape = 's32[2]{0}', space=sflag, size = 0x8, scoped, tag = 'scoped memory for tpu_custom_call.1']
    #allocation11 [shape = 'u8[1024]{0}', space=vmem, size = 0x400, scoped, tag = 'input window, operand 2']
    #allocation12 [shape = 'u8[32768]{0}', space=vmem, size = 0x8000, scoped, tag = 'input window, operand 3, single buffered']
    #allocation13 [shape = 's32[1]{0}', space=sflag, size = 0x4, scoped, tag = 'scoped memory for tpu_custom_call.1']
    #allocation14 [shape = 'u8[32768]{0}', space=vmem, size = 0x8000, scoped, tag = 'input window, operand 5, single buffered']
    #allocation15 [shape = 'u8[32768]{0}', space=vmem, size = 0x8000, scoped, tag = 'input window, operand 7, single buffered']
    #allocation16 [shape = 's32[1]{0}', space=sflag, size = 0x4, scoped, tag = 'scoped memory for tpu_custom_call.1']
    #allocation17 [shape = 'u8[32768]{0}', space=vmem, size = 0x8000, scoped, tag = 'input window, operand 9, single buffered']
    #allocation18 [shape = 'u8[8192]{0}', space=vmem, size = 0x2000, scoped, tag = 'output window, operand 0']
    %16 = vsyncpa [#allocation7], 0
    %s17 = scalar_lea.sflag [#allocation7], 1
    %18 = vsyncpa %s17, 0
    %19 = vsyncpa [#allocation10], 0
    %s20 = scalar_lea.sflag [#allocation10], 1
    %21 = vsyncpa %s20, 0
    %22 = vsyncpa [#allocation13], 0
    %23 = vsyncpa [#allocation16], 0
    %24 = vsyncpa [#allocation8], 0
    %s25 = scalar_lea.sflag [#allocation8], 1
    %26 = vsyncpa %s25, 0
    loop: start=0, step=1, limit=6
    $region2: #{tpu_custom_call.1} parent=1 // loop_pre_header
      _
    $region3: #{tpu_custom_call.1} parent=1 // loop_header
      %s28 = sphi 0, %s32
      %p29 = scmp.ge.s32.totalorder %s28, 6
      %s35 = sphi 0, %s47
      %s36 = sphi 0, %s43
      %s37 = sphi 0, %s35
      %s38 = sphi 0, %s36
      %s39 = sphi 0, %s37
      %s40 = sphi 0, %s38
      %s52 = sphi 0, %s54
      %s55 = sphi 0, %s52
      %s56 = sphi 0, %s55
      %s72 = sphi 0, %s56
      %s78 = sphi 0, %s80
      %s81 = sphi 0, %s78
      %s82 = sphi 0, %s81
      %s98 = sphi 0, %s82
      %s104 = sphi 0, %s106
      %s107 = sphi 0, %s104
      %s108 = sphi 0, %s107
      %s124 = sphi 0, %s108
      %s128 = sphi 0, %s128
      %s130 = sphi 0, %s128
      %s131 = sphi 0, %s130
      %s145 = sphi 0, %s131
      %s149 = sphi 0, %s149
      %s151 = sphi 0, %s149
      %s152 = sphi 0, %s151
      %s166 = sphi 0, %s152
      %s170 = sphi 0, %s170
      %s172 = sphi 0, %s170
      %s173 = sphi 0, %s172
      %s187 = sphi 0, %s173
      %s191 = sphi 0, %s191
      %s193 = sphi 0, %s191
      %s194 = sphi 0, %s193
      %s208 = sphi 0, %s194
      %s212 = sphi 0, %s212
      %s214 = sphi 0, %s212
      %s215 = sphi 0, %s214
      %s229 = sphi 0, %s215
      %s233 = sphi 0, %s233
      %s235 = sphi 0, %s233
      %s236 = sphi 0, %s235
      %s250 = sphi 0, %s236
      %s254 = sphi 0, %s254
      %s256 = sphi 0, %s254
      %s257 = sphi 0, %s256
      %s271 = sphi 0, %s257
      %s275 = sphi 0, %s275
      %s277 = sphi 0, %s275
      %s278 = sphi 0, %s277
      %s292 = sphi 0, %s278
      %s300 = sphi 0, %s302
      %s303 = sphi 0, %s300
      %s304 = sphi 0, %s303
      %s320 = sphi 0, %s304
    $region4: #{tpu_custom_call.1} parent=1 // loop_header_branch
      %31 = sbr.rel (%p29) target = $region8
    $region5: #{tpu_custom_call.1} parent=1 // loop_body
      %s33 = ssub.s32 %s28, 1
      %s34 = ssub.s32 %s28, 2
      %s41 = sadd.s32 1, %s36
      %p42 = scmp.ge.s32.totalorder %s41, 2
      %s43 = scalar_select %p42, 0, %s41
      %s44 = sadd.s32 1, %s35
      %s45 = scalar_select %p42, %s44, %s35
      %p46 = scmp.ge.s32.totalorder %s45, 2
      %s47 = scalar_select %p46, 0, %s45
      %s48 = ssub.s32 %s35, %s47
      %s49 = ssub.s32 %s36, %s43
      %s50 = sor.u32 %s48, %s49
      %p51 = scmp.eq.s32.totalorder %s50, 0
      %s53 = sadd.s32 %s52, 1
      %s54 = scalar_select %p51, %s52, %s53
      %p57 = pneg %p51
      %p58 = scmp.eq.s32.totalorder %s28, 3
      %p59 = por %p57, %p58
      %p60 = scmp.ne.s32.totalorder %s52, %s55
      %p61 = scmp.eq.s32.totalorder %s28, 0
      %p62 = por %p60, %p61
      %p63 = scmp.ne.s32.totalorder %s52, %s55
      %p64 = scmp.eq.s32.totalorder %s33, 3
      %p65 = por %p63, %p64
      %p66 = scmp.ne.s32.totalorder %s55, %s56
      %p67 = scmp.eq.s32.totalorder %s33, 0
      %p68 = por %p66, %p67
      %p69 = scmp.ne.s32.totalorder %s55, %s56
      %p70 = scmp.eq.s32.totalorder %s34, 3
      %p71 = por %p69, %p70
      %p73 = scmp.ne.s32.totalorder %s56, %s72
      %p74 = scmp.eq.s32.totalorder %s34, 0
      %p75 = por %p73, %p74
      %s76 = ssub.s32 %s35, %s47
      %p77 = scmp.eq.s32.totalorder %s76, 0
      %s79 = sadd.s32 %s78, 1
      %s80 = scalar_select %p77, %s78, %s79
      %p83 = pneg %p77
      %p84 = scmp.eq.s32.totalorder %s28, 3
      %p85 = por %p83, %p84
      %p86 = scmp.ne.s32.totalorder %s78, %s81
      %p87 = scmp.eq.s32.totalorder %s28, 0
      %p88 = por %p86, %p87
      %p89 = scmp.ne.s32.totalorder %s78, %s81
      %p90 = scmp.eq.s32.totalorder %s33, 3
      %p91 = por %p89, %p90
      %p92 = scmp.ne.s32.totalorder %s81, %s82
      %p93 = scmp.eq.s32.totalorder %s33, 0
      %p94 = por %p92, %p93
      %p95 = scmp.ne.s32.totalorder %s81, %s82
      %p96 = scmp.eq.s32.totalorder %s34, 3
      %p97 = por %p95, %p96
      %p99 = scmp.ne.s32.totalorder %s82, %s98
      %p100 = scmp.eq.s32.totalorder %s34, 0
      %p101 = por %p99, %p100
      %s102 = ssub.s32 %s35, %s47
      %p103 = scmp.eq.s32.totalorder %s102, 0
      %s105 = sadd.s32 %s104, 1
      %s106 = scalar_select %p103, %s104, %s105
      %p109 = pneg %p103
      %p110 = scmp.eq.s32.totalorder %s28, 3
      %p111 = por %p109, %p110
      %p112 = scmp.ne.s32.totalorder %s104, %s107
      %p113 = scmp.eq.s32.totalorder %s28, 0
      %p114 = por %p112, %p113
      %p115 = scmp.ne.s32.totalorder %s104, %s107
      %p116 = scmp.eq.s32.totalorder %s33, 3
      %p117 = por %p115, %p116
      %p118 = scmp.ne.s32.totalorder %s107, %s108
      %p119 = scmp.eq.s32.totalorder %s33, 0
      %p120 = por %p118, %p119
      %p121 = scmp.ne.s32.totalorder %s107, %s108
      %p122 = scmp.eq.s32.totalorder %s34, 3
      %p123 = por %p121, %p122
      %p125 = scmp.ne.s32.totalorder %s108, %s124
      %p126 = scmp.eq.s32.totalorder %s34, 0
      %p127 = por %p125, %p126
      %s129 = sadd.s32 %s128, 1
      %p132 = scmp.eq.s32.totalorder %s28, 3
      %p133 = scmp.ne.s32.totalorder %s128, %s130
      %p134 = scmp.eq.s32.totalorder %s28, 0
      %p135 = por %p133, %p134
      %p136 = scmp.ne.s32.totalorder %s128, %s130
      %p137 = scmp.eq.s32.totalorder %s33, 3
      %p138 = por %p136, %p137
      %p139 = scmp.ne.s32.totalorder %s130, %s131
      %p140 = scmp.eq.s32.totalorder %s33, 0
      %p141 = por %p139, %p140
      %p142 = scmp.ne.s32.totalorder %s130, %s131
      %p143 = scmp.eq.s32.totalorder %s34, 3
      %p144 = por %p142, %p143
      %p146 = scmp.ne.s32.totalorder %s131, %s145
      %p147 = scmp.eq.s32.totalorder %s34, 0
      %p148 = por %p146, %p147
      %s150 = sadd.s32 %s149, 1
      %p153 = scmp.eq.s32.totalorder %s28, 3
      %p154 = scmp.ne.s32.totalorder %s149, %s151
      %p155 = scmp.eq.s32.totalorder %s28, 0
      %p156 = por %p154, %p155
      %p157 = scmp.ne.s32.totalorder %s149, %s151
      %p158 = scmp.eq.s32.totalorder %s33, 3
      %p159 = por %p157, %p158
      %p160 = scmp.ne.s32.totalorder %s151, %s152
      %p161 = scmp.eq.s32.totalorder %s33, 0
      %p162 = por %p160, %p161
      %p163 = scmp.ne.s32.totalorder %s151, %s152
      %p164 = scmp.eq.s32.totalorder %s34, 3
      %p165 = por %p163, %p164
      %p167 = scmp.ne.s32.totalorder %s152, %s166
      %p168 = scmp.eq.s32.totalorder %s34, 0
      %p169 = por %p167, %p168
      %s171 = sadd.s32 %s170, 1
      %p174 = scmp.eq.s32.totalorder %s28, 3
      %p175 = scmp.ne.s32.totalorder %s170, %s172
      %p176 = scmp.eq.s32.totalorder %s28, 0
      %p177 = por %p175, %p176
      %p178 = scmp.ne.s32.totalorder %s170, %s172
      %p179 = scmp.eq.s32.totalorder %s33, 3
      %p180 = por %p178, %p179
      %p181 = scmp.ne.s32.totalorder %s172, %s173
      %p182 = scmp.eq.s32.totalorder %s33, 0
      %p183 = por %p181, %p182
      %p184 = scmp.ne.s32.totalorder %s172, %s173
      %p185 = scmp.eq.s32.totalorder %s34, 3
      %p186 = por %p184, %p185
      %p188 = scmp.ne.s32.totalorder %s173, %s187
      %p189 = scmp.eq.s32.totalorder %s34, 0
      %p190 = por %p188, %p189
      %s192 = sadd.s32 %s191, 1
      %p195 = scmp.eq.s32.totalorder %s28, 3
      %p196 = scmp.ne.s32.totalorder %s191, %s193
      %p197 = scmp.eq.s32.totalorder %s28, 0
      %p198 = por %p196, %p197
      %p199 = scmp.ne.s32.totalorder %s191, %s193
      %p200 = scmp.eq.s32.totalorder %s33, 3
      %p201 = por %p199, %p200
      %p202 = scmp.ne.s32.totalorder %s193, %s194
      %p203 = scmp.eq.s32.totalorder %s33, 0
      %p204 = por %p202, %p203
      %p205 = scmp.ne.s32.totalorder %s193, %s194
      %p206 = scmp.eq.s32.totalorder %s34, 3
      %p207 = por %p205, %p206
      %p209 = scmp.ne.s32.totalorder %s194, %s208
      %p210 = scmp.eq.s32.totalorder %s34, 0
      %p211 = por %p209, %p210
      %s213 = sadd.s32 %s212, 1
      %p216 = scmp.eq.s32.totalorder %s28, 3
      %p217 = scmp.ne.s32.totalorder %s212, %s214
      %p218 = scmp.eq.s32.totalorder %s28, 0
      %p219 = por %p217, %p218
      %p220 = scmp.ne.s32.totalorder %s212, %s214
      %p221 = scmp.eq.s32.totalorder %s33, 3
      %p222 = por %p220, %p221
      %p223 = scmp.ne.s32.totalorder %s214, %s215
      %p224 = scmp.eq.s32.totalorder %s33, 0
      %p225 = por %p223, %p224
      %p226 = scmp.ne.s32.totalorder %s214, %s215
      %p227 = scmp.eq.s32.totalorder %s34, 3
      %p228 = por %p226, %p227
      %p230 = scmp.ne.s32.totalorder %s215, %s229
      %p231 = scmp.eq.s32.totalorder %s34, 0
      %p232 = por %p230, %p231
      %s234 = sadd.s32 %s233, 1
      %p237 = scmp.eq.s32.totalorder %s28, 3
      %p238 = scmp.ne.s32.totalorder %s233, %s235
      %p239 = scmp.eq.s32.totalorder %s28, 0
      %p240 = por %p238, %p239
      %p241 = scmp.ne.s32.totalorder %s233, %s235
      %p242 = scmp.eq.s32.totalorder %s33, 3
      %p243 = por %p241, %p242
      %p244 = scmp.ne.s32.totalorder %s235, %s236
      %p245 = scmp.eq.s32.totalorder %s33, 0
      %p246 = por %p244, %p245
      %p247 = scmp.ne.s32.totalorder %s235, %s236
      %p248 = scmp.eq.s32.totalorder %s34, 3
      %p249 = por %p247, %p248
      %p251 = scmp.ne.s32.totalorder %s236, %s250
      %p252 = scmp.eq.s32.totalorder %s34, 0
      %p253 = por %p251, %p252
      %s255 = sadd.s32 %s254, 1
      %p258 = scmp.eq.s32.totalorder %s28, 3
      %p259 = scmp.ne.s32.totalorder %s254, %s256
      %p260 = scmp.eq.s32.totalorder %s28, 0
      %p261 = por %p259, %p260
      %p262 = scmp.ne.s32.totalorder %s254, %s256
      %p263 = scmp.eq.s32.totalorder %s33, 3
      %p264 = por %p262, %p263
      %p265 = scmp.ne.s32.totalorder %s256, %s257
      %p266 = scmp.eq.s32.totalorder %s33, 0
      %p267 = por %p265, %p266
      %p268 = scmp.ne.s32.totalorder %s256, %s257
      %p269 = scmp.eq.s32.totalorder %s34, 3
      %p270 = por %p268, %p269
      %p272 = scmp.ne.s32.totalorder %s257, %s271
      %p273 = scmp.eq.s32.totalorder %s34, 0
      %p274 = por %p272, %p273
      %s276 = sadd.s32 %s275, 1
      %p279 = scmp.eq.s32.totalorder %s28, 3
      %p280 = scmp.ne.s32.totalorder %s275, %s277
      %p281 = scmp.eq.s32.totalorder %s28, 0
      %p282 = por %p280, %p281
      %p283 = scmp.ne.s32.totalorder %s275, %s277
      %p284 = scmp.eq.s32.totalorder %s33, 3
      %p285 = por %p283, %p284
      %p286 = scmp.ne.s32.totalorder %s277, %s278
      %p287 = scmp.eq.s32.totalorder %s33, 0
      %p288 = por %p286, %p287
      %p289 = scmp.ne.s32.totalorder %s277, %s278
      %p290 = scmp.eq.s32.totalorder %s34, 3
      %p291 = por %p289, %p290
      %p293 = scmp.ne.s32.totalorder %s278, %s292
      %p294 = scmp.eq.s32.totalorder %s34, 0
      %p295 = por %p293, %p294
      %s296 = ssub.s32 %s35, %s47
      %s297 = ssub.s32 %s36, %s43
      %s298 = sor.u32 %s296, %s297
      %p299 = scmp.eq.s32.totalorder %s298, 0
      %s301 = sadd.s32 %s300, 1
      %s302 = scalar_select %p299, %s300, %s301
      %p305 = pneg %p299
      %p306 = scmp.eq.s32.totalorder %s28, 3
      %p307 = por %p305, %p306
      %p308 = scmp.ne.s32.totalorder %s300, %s303
      %p309 = scmp.eq.s32.totalorder %s28, 0
      %p310 = por %p308, %p309
      %p311 = scmp.ne.s32.totalorder %s300, %s303
      %p312 = scmp.eq.s32.totalorder %s33, 3
      %p313 = por %p311, %p312
      %p314 = scmp.ne.s32.totalorder %s303, %s304
      %p315 = scmp.eq.s32.totalorder %s33, 0
      %p316 = por %p314, %p315
      %p317 = scmp.ne.s32.totalorder %s303, %s304
      %p318 = scmp.eq.s32.totalorder %s34, 3
      %p319 = por %p317, %p318
      %p321 = scmp.ne.s32.totalorder %s304, %s320
      %p322 = scmp.eq.s32.totalorder %s34, 0
      %p323 = por %p321, %p322
      %p324 = scmp.le.s32.totalorder 1, %s28
      %p325 = scmp.lt.s32.totalorder %s28, 5
      %p326 = pnand %p324, %p325
      %p327 = pneg %p326
      // Predicated region
      $region9: #{tpu_custom_call.1} parent=5 // pred_check
        _
      $region10: #{tpu_custom_call.1} parent=5 // pred_check_branch
        %329 = sbr.rel (%p326) target = $region12
      $region11: #{tpu_custom_call.1} parent=5 // pred_region
        %s330 = ssub.s32 %s28, 1
        // Predicated region
        $region13: #{tpu_custom_call.1} parent=11 // pred_check
          %p331 = pneg %p141
        $region14: #{tpu_custom_call.1} parent=11 // pred_check_branch
          %333 = sbr.rel (%p331) target = $region16
        $region15: #{tpu_custom_call.1} parent=11 // pred_region
          %335 = vsyncadd [#allocation13], 0
          %s336 = sshll.u32 %s3, 4
          %s337 = int_to_ptr.hbm [resolvable:$true] %s336
          %s338 = sshll.u32 [#allocation12], 4
          %s339 = int_to_ptr.vmem [resolvable:$true] %s338
          %344 = dma.hbm_to_vmem [thread:$0]  %s337, 1024, %s339, [#allocation13], 64, 64, 4
        $region16: #{tpu_custom_call.1} parent=11 // pred_fallthru
          _
        // Predicated region
        $region17: #{tpu_custom_call.1} parent=11 // pred_check
          %p345 = pneg %p162
        $region18: #{tpu_custom_call.1} parent=11 // pred_check_branch
          %347 = sbr.rel (%p345) target = $region20
        $region19: #{tpu_custom_call.1} parent=11 // pred_region
          _
        $region20: #{tpu_custom_call.1} parent=11 // pred_fallthru
          _
        // Predicated region
        $region21: #{tpu_custom_call.1} parent=11 // pred_check
          %p348 = pneg %p183
        $region22: #{tpu_custom_call.1} parent=11 // pred_check_branch
          %350 = sbr.rel (%p348) target = $region24
        $region23: #{tpu_custom_call.1} parent=11 // pred_region
          %352 = vsyncadd [#allocation13], 0
          %s353 = sshll.u32 %s5, 4
          %s354 = int_to_ptr.hbm [resolvable:$true] %s353
          %s355 = sshll.u32 [#allocation14], 4
          %s356 = int_to_ptr.vmem [resolvable:$true] %s355
          %361 = dma.hbm_to_vmem [thread:$0]  %s354, 1024, %s356, [#allocation13], 64, 64, 4
        $region24: #{tpu_custom_call.1} parent=11 // pred_fallthru
          _
        // Predicated region
        $region25: #{tpu_custom_call.1} parent=11 // pred_check
          %p362 = pneg %p204
        $region26: #{tpu_custom_call.1} parent=11 // pred_check_branch
          %364 = sbr.rel (%p362) target = $region28
        $region27: #{tpu_custom_call.1} parent=11 // pred_region
          _
        $region28: #{tpu_custom_call.1} parent=11 // pred_fallthru
          _
        // Predicated region
        $region29: #{tpu_custom_call.1} parent=11 // pred_check
          %p365 = pneg %p225
        $region30: #{tpu_custom_call.1} parent=11 // pred_check_branch
          %367 = sbr.rel (%p365) target = $region32
        $region31: #{tpu_custom_call.1} parent=11 // pred_region
          %369 = vsyncadd [#allocation16], 0
          %s370 = sshll.u32 %s7, 4
          %s371 = int_to_ptr.hbm [resolvable:$true] %s370
          %s372 = sshll.u32 [#allocation15], 4
          %s373 = int_to_ptr.vmem [resolvable:$true] %s372
          %378 = dma.hbm_to_vmem [thread:$0]  %s371, 1024, %s373, [#allocation16], 64, 64, 4
        $region32: #{tpu_custom_call.1} parent=11 // pred_fallthru
          _
        // Predicated region
        $region33: #{tpu_custom_call.1} parent=11 // pred_check
          %p379 = pneg %p246
        $region34: #{tpu_custom_call.1} parent=11 // pred_check_branch
          %381 = sbr.rel (%p379) target = $region36
        $region35: #{tpu_custom_call.1} parent=11 // pred_region
          _
        $region36: #{tpu_custom_call.1} parent=11 // pred_fallthru
          _
        // Predicated region
        $region37: #{tpu_custom_call.1} parent=11 // pred_check
          %p382 = pneg %p267
        $region38: #{tpu_custom_call.1} parent=11 // pred_check_branch
          %384 = sbr.rel (%p382) target = $region40
        $region39: #{tpu_custom_call.1} parent=11 // pred_region
          %386 = vsyncadd [#allocation16], 0
          %s387 = sshll.u32 %s9, 4
          %s388 = int_to_ptr.hbm [resolvable:$true] %s387
          %s389 = sshll.u32 [#allocation17], 4
          %s390 = int_to_ptr.vmem [resolvable:$true] %s389
          %395 = dma.hbm_to_vmem [thread:$0]  %s388, 1024, %s390, [#allocation16], 64, 64, 4
        $region40: #{tpu_custom_call.1} parent=11 // pred_fallthru
          _
        // Predicated region
        $region41: #{tpu_custom_call.1} parent=11 // pred_check
          %p396 = pneg %p288
        $region42: #{tpu_custom_call.1} parent=11 // pred_check_branch
          %398 = sbr.rel (%p396) target = $region44
        $region43: #{tpu_custom_call.1} parent=11 // pred_region
          _
        $region44: #{tpu_custom_call.1} parent=11 // pred_fallthru
          _
      $region12: #{tpu_custom_call.1} parent=5 // pred_fallthru
        _
      %p399 = scmp.lt.s32.totalorder %s28, 4
      // Predicated region
      $region45: #{tpu_custom_call.1} parent=5 // pred_check
        %p400 = pneg %p399
      $region46: #{tpu_custom_call.1} parent=5 // pred_check_branch
        %402 = sbr.rel (%p400) target = $region48
      $region47: #{tpu_custom_call.1} parent=5 // pred_region
        // Predicated region
        $region49: #{tpu_custom_call.1} parent=47 // pred_check
          %p403 = pneg %p62
        $region50: #{tpu_custom_call.1} parent=47 // pred_check_branch
          %405 = sbr.rel (%p403) target = $region52
        $region51: #{tpu_custom_call.1} parent=47 // pred_region
          %s406 = sand.u32 %s52, 1
          %s407 = scalar_lea.sflag [#allocation7], %s406
          %s408 = sand.u32 %s52, 1
          %s409 = smul.addr %s408, 4
          %s410 = scalar_lea.vmem [#allocation6], %s409
          %412 = vsyncadd %s407, 0
          %s413 = smul.addr %s35, 2
          %s414 = sadd.s32 %s36, %s413
          %s415 = smul.addr %s414, 4
          %s416 = scalar_lea.hbm %s0, %s415
          %s418 = sshll.u32 %s416, 4
          %s419 = int_to_ptr.hbm [resolvable:$true] %s418
          %s420 = sshll.u32 %s410, 4
          %s421 = int_to_ptr.vmem [resolvable:$true] %s420
          %423 = dma.hbm_to_vmem [thread:$0]  %s419, 64, %s421, %s407
        $region52: #{tpu_custom_call.1} parent=47 // pred_fallthru
          _
        // Predicated region
        $region53: #{tpu_custom_call.1} parent=47 // pred_check
          %p424 = pneg %p88
        $region54: #{tpu_custom_call.1} parent=47 // pred_check_branch
          %426 = sbr.rel (%p424) target = $region56
        $region55: #{tpu_custom_call.1} parent=47 // pred_region
          %s427 = sand.u32 %s28, 1
          %s428 = scalar_lea.sflag [#allocation10], %s427
          %s429 = sand.u32 %s78, 1
          %s430 = smul.addr %s429, 8
          %s431 = scalar_lea.vmem [#allocation9], %s430
          %433 = vsyncadd %s428, 0
          %s434 = smul.addr %s35, 2
          %s435 = smul.addr %s434, 4
          %s436 = scalar_lea.hbm %s1, %s435
          %s437 = sshll.u32 %s436, 4
          %s438 = int_to_ptr.hbm [resolvable:$true] %s437
          %s439 = sshll.u32 %s431, 4
          %s440 = int_to_ptr.vmem [resolvable:$true] %s439
          %445 = dma.hbm_to_vmem [thread:$0]  %s438, 128, %s440, %s428, 64, 64, 4
        $region56: #{tpu_custom_call.1} parent=47 // pred_fallthru
          _
        // Predicated region
        $region57: #{tpu_custom_call.1} parent=47 // pred_check
          %p446 = pneg %p114
        $region58: #{tpu_custom_call.1} parent=47 // pred_check_branch
          %448 = sbr.rel (%p446) target = $region60
        $region59: #{tpu_custom_call.1} parent=47 // pred_region
          %s449 = sand.u32 %s28, 1
          %s450 = scalar_lea.sflag [#allocation10], %s449
          %s451 = sand.u32 %s104, 1
          %s452 = scalar_lea.vmem [#allocation11], %s451
          %454 = vsyncadd %s450, 0
          %s455 = scalar_lea.hbm %s2, %s35
          %s457 = sshll.u32 %s455, 4
          %s458 = int_to_ptr.hbm [resolvable:$true] %s457
          %s459 = sshll.u32 %s452, 4
          %s460 = int_to_ptr.vmem [resolvable:$true] %s459
          %462 = dma.hbm_to_vmem [thread:$0]  %s458, 16, %s460, %s450
        $region60: #{tpu_custom_call.1} parent=47 // pred_fallthru
          _
      $region48: #{tpu_custom_call.1} parent=5 // pred_fallthru
        _
      %p463 = scmp.le.s32.totalorder 1, %s28
      %p464 = scmp.lt.s32.totalorder %s28, 5
      %p465 = pnand %p463, %p464
      %p466 = pneg %p465
      // Predicated region
      $region61: #{tpu_custom_call.1} parent=5 // pred_check
        _
      $region62: #{tpu_custom_call.1} parent=5 // pred_check_branch
        %468 = sbr.rel (%p465) target = $region64
      $region63: #{tpu_custom_call.1} parent=5 // pred_region
        %s469 = ssub.s32 %s28, 1
        %s470 = sand.u32 %s55, 1
        %s471 = scalar_lea.sflag [#allocation7], %s470
        %s472 = sand.u32 %s55, 1
        %s473 = smul.addr %s472, 4
        %s474 = scalar_lea.vmem [#allocation6], %s473
        // Predicated region
        $region65: #{tpu_custom_call.1} parent=63 // pred_check
          %p475 = pneg %p68
        $region66: #{tpu_custom_call.1} parent=63 // pred_check_branch
          %477 = sbr.rel (%p475) target = $region68
        $region67: #{tpu_custom_call.1} parent=63 // pred_region
          %479 = dma.done %s471, 64
        $region68: #{tpu_custom_call.1} parent=63 // pred_fallthru
          _
        %s480 = sand.u32 %s33, 1
        %s481 = scalar_lea.sflag [#allocation10], %s480
        %s482 = sand.u32 %s81, 1
        %s483 = smul.addr %s482, 8
        %s484 = scalar_lea.vmem [#allocation9], %s483
        // Predicated region
        $region69: #{tpu_custom_call.1} parent=63 // pred_check
          %p485 = pneg %p94
        $region70: #{tpu_custom_call.1} parent=63 // pred_check_branch
          %487 = sbr.rel (%p485) target = $region72
        $region71: #{tpu_custom_call.1} parent=63 // pred_region
          %489 = dma.done %s481, 128
        $region72: #{tpu_custom_call.1} parent=63 // pred_fallthru
          _
        %s490 = sand.u32 %s33, 1
        %s491 = scalar_lea.sflag [#allocation10], %s490
        %s492 = sand.u32 %s107, 1
        %s493 = scalar_lea.vmem [#allocation11], %s492
        // Predicated region
        $region73: #{tpu_custom_call.1} parent=63 // pred_check
          %p494 = pneg %p120
        $region74: #{tpu_custom_call.1} parent=63 // pred_check_branch
          %496 = sbr.rel (%p494) target = $region76
        $region75: #{tpu_custom_call.1} parent=63 // pred_region
          %498 = dma.done %s491, 16
        $region76: #{tpu_custom_call.1} parent=63 // pred_fallthru
          _
        // Predicated region
        $region77: #{tpu_custom_call.1} parent=63 // pred_check
          %p499 = pneg %p141
        $region78: #{tpu_custom_call.1} parent=63 // pred_check_branch
          %501 = sbr.rel (%p499) target = $region80
        $region79: #{tpu_custom_call.1} parent=63 // pred_region
          %503 = dma.done [#allocation13], 1024
        $region80: #{tpu_custom_call.1} parent=63 // pred_fallthru
          _
        // Predicated region
        $region81: #{tpu_custom_call.1} parent=63 // pred_check
          %p504 = pneg %p183
        $region82: #{tpu_custom_call.1} parent=63 // pred_check_branch
          %506 = sbr.rel (%p504) target = $region84
        $region83: #{tpu_custom_call.1} parent=63 // pred_region
          %508 = dma.done [#allocation13], 1024
        $region84: #{tpu_custom_call.1} parent=63 // pred_fallthru
          _
        // Predicated region
        $region85: #{tpu_custom_call.1} parent=63 // pred_check
          %p509 = pneg %p225
        $region86: #{tpu_custom_call.1} parent=63 // pred_check_branch
          %511 = sbr.rel (%p509) target = $region88
        $region87: #{tpu_custom_call.1} parent=63 // pred_region
          %513 = dma.done [#allocation16], 1024
        $region88: #{tpu_custom_call.1} parent=63 // pred_fallthru
          _
        // Predicated region
        $region89: #{tpu_custom_call.1} parent=63 // pred_check
          %p514 = pneg %p267
        $region90: #{tpu_custom_call.1} parent=63 // pred_check_branch
          %516 = sbr.rel (%p514) target = $region92
        $region91: #{tpu_custom_call.1} parent=63 // pred_region
          %518 = dma.done [#allocation16], 1024
        $region92: #{tpu_custom_call.1} parent=63 // pred_fallthru
          _
        %s519 = sand.u32 %s55, 1
        %s520 = scalar_lea.sflag [#allocation7], %s519
        %s521 = sand.u32 %s55, 1
        %s522 = smul.addr %s521, 4
        %s523 = scalar_lea.vmem [#allocation6], %s522
        %p524 = pneg %p68
        %p525 = pneg %p65
        %s526 = sand.u32 %s33, 1
        %s527 = scalar_lea.sflag [#allocation10], %s526
        %s528 = sand.u32 %s81, 1
        %s529 = smul.addr %s528, 8
        %s530 = scalar_lea.vmem [#allocation9], %s529
        %p531 = pneg %p94
        %p532 = pneg %p91
        %s533 = sand.u32 %s33, 1
        %s534 = scalar_lea.sflag [#allocation10], %s533
        %s535 = sand.u32 %s107, 1
        %s536 = scalar_lea.vmem [#allocation11], %s535
        %p537 = pneg %p120
        %p538 = pneg %p117
        %p539 = pneg %p141
        %p540 = pneg %p138
        %p541 = pneg %p162
        %p542 = pneg %p159
        %p543 = pneg %p183
        %p544 = pneg %p180
        %p545 = pneg %p204
        %p546 = pneg %p201
        %p547 = pneg %p225
        %p548 = pneg %p222
        %p549 = pneg %p246
        %p550 = pneg %p243
        %p551 = pneg %p267
        %p552 = pneg %p264
        %p553 = pneg %p288
        %p554 = pneg %p285
        %p555 = pneg %p316
        %p556 = pneg %p313
        %s557 = sand.u32 %s303, 1
        %s558 = scalar_lea.sflag [#allocation8], %s557
        %s559 = sand.u32 %s303, 1
        %s560 = smul.addr %s559, 8
        %s561 = scalar_lea.vmem [#allocation18], %s560
        %p563 = scmp.eq.s32.totalorder %s38, 0
        // Predicated region
        $region93: #{tpu_custom_call.1} parent=63 // pred_check
          %p564 = pneg %p563
        $region94: #{tpu_custom_call.1} parent=63 // pred_check_branch
          %566 = sbr.rel (%p564) target = $region96
        $region95: #{tpu_custom_call.1} parent=63 // pred_region
          %v567 = vld [vmem:[%s484] sm:$0xf]
          %v568 = vld [vmem:[%s484 + $0x4] sm:$0xf]
          %v569 = vld [vmem:[#allocation14] sm:$0xf]
          %v570 = vld [vmem:[#allocation14 + $0x4] sm:$0xf]
          %v571 = vld [vmem:[#allocation14 + $0x8] sm:$0xf]
          %v572 = vld [vmem:[#allocation14 + $0xc] sm:$0xf]
          %v573 = vld [vmem:[#allocation14 + $0x10] sm:$0xf]
          %v574 = vld [vmem:[#allocation14 + $0x14] sm:$0xf]
          %v575 = vld [vmem:[#allocation14 + $0x18] sm:$0xf]
          %v576 = vld [vmem:[#allocation14 + $0x1c] sm:$0xf]
          %v577 = vld [vmem:[#allocation14 + $0x20] sm:$0xf]
          %v578 = vld [vmem:[#allocation14 + $0x24] sm:$0xf]
          %v579 = vld [vmem:[#allocation14 + $0x28] sm:$0xf]
          %v580 = vld [vmem:[#allocation14 + $0x2c] sm:$0xf]
          %v581 = vld [vmem:[#allocation14 + $0x30] sm:$0xf]
          %v582 = vld [vmem:[#allocation14 + $0x34] sm:$0xf]
          %v583 = vld [vmem:[#allocation14 + $0x38] sm:$0xf]
          %v584 = vld [vmem:[#allocation14 + $0x3c] sm:$0xf]
          %v585 = vld [vmem:[%s6] sm:$0x1]
          %v587 = vperm.slane %v585, 0
          %v591 = vunpack.c.l.b16 %v567
          %v592 = vunpack.c.l.b16 %v568
          %v593 = vpack.c.b16 %v592, %v591
          %v611 = vunpack.c.l.b16 %v569
          %v612 = vunpack.c.l.b16 %v570
          %v613 = vunpack.c.l.b16 %v571
          %v614 = vunpack.c.l.b16 %v572
          %v615 = vunpack.c.l.b16 %v573
          %v616 = vunpack.c.l.b16 %v574
          %v617 = vunpack.c.l.b16 %v575
          %v618 = vunpack.c.l.b16 %v576
          %v619 = vunpack.c.l.b16 %v577
          %v620 = vunpack.c.l.b16 %v578
          %v621 = vunpack.c.l.b16 %v579
          %v622 = vunpack.c.l.b16 %v580
          %v623 = vunpack.c.l.b16 %v581
          %v624 = vunpack.c.l.b16 %v582
          %v625 = vunpack.c.l.b16 %v583
          %v626 = vunpack.c.l.b16 %v584
          %v627 = vpack.c.b16 %v612, %v611
          %v628 = vpack.c.b16 %v614, %v613
          %v629 = vpack.c.b16 %v616, %v615
          %v630 = vpack.c.b16 %v618, %v617
          %v631 = vpack.c.b16 %v620, %v619
          %v632 = vpack.c.b16 %v622, %v621
          %v633 = vpack.c.b16 %v624, %v623
          %v634 = vpack.c.b16 %v626, %v625
          %643 = vmatpush.bf16.msra.mxu0 %v634
          %644 = vmatpush.bf16.msra.mxu0 %v633
          %645 = vmatpush.bf16.msra.mxu0 %v632
          %646 = vmatpush.bf16.msra.mxu0 %v631
          %647 = vmatpush.bf16.msra.mxu0 %v630
          %648 = vmatpush.bf16.msra.mxu0 %v629
          %649 = vmatpush.bf16.msra.mxu0 %v628
          %650 = vmatpush.bf16.msra.mxu0 %v627
          %651 = vmatmul.bf16.gmra.mxu0 %v593
          %v652 = vpop.f32.mrf.mxu0
          %v653 = vadd.f32 %v587, %v652
          %v654 = vpop.f32.mrf.mxu0
          %v655 = vadd.f32 %v587, %v654
          %656 = vdwg.mxu0
          %v657 = vld [vmem:[#allocation15] sm:$0xf]
          %v658 = vld [vmem:[#allocation15 + $0x4] sm:$0xf]
          %v659 = vld [vmem:[#allocation15 + $0x8] sm:$0xf]
          %v660 = vld [vmem:[#allocation15 + $0xc] sm:$0xf]
          %v661 = vld [vmem:[#allocation15 + $0x10] sm:$0xf]
          %v662 = vld [vmem:[#allocation15 + $0x14] sm:$0xf]
          %v663 = vld [vmem:[#allocation15 + $0x18] sm:$0xf]
          %v664 = vld [vmem:[#allocation15 + $0x1c] sm:$0xf]
          %v665 = vld [vmem:[#allocation15 + $0x20] sm:$0xf]
          %v666 = vld [vmem:[#allocation15 + $0x24] sm:$0xf]
          %v667 = vld [vmem:[#allocation15 + $0x28] sm:$0xf]
          %v668 = vld [vmem:[#allocation15 + $0x2c] sm:$0xf]
          %v669 = vld [vmem:[#allocation15 + $0x30] sm:$0xf]
          %v670 = vld [vmem:[#allocation15 + $0x34] sm:$0xf]
          %v671 = vld [vmem:[#allocation15 + $0x38] sm:$0xf]
          %v672 = vld [vmem:[#allocation15 + $0x3c] sm:$0xf]
          %v673 = vld [vmem:[%s8] sm:$0x1]
          %v675 = vperm.slane %v673, 0
          %v693 = vunpack.c.l.b16 %v657
          %v694 = vunpack.c.l.b16 %v658
          %v695 = vunpack.c.l.b16 %v659
          %v696 = vunpack.c.l.b16 %v660
          %v697 = vunpack.c.l.b16 %v661
          %v698 = vunpack.c.l.b16 %v662
          %v699 = vunpack.c.l.b16 %v663
          %v700 = vunpack.c.l.b16 %v664
          %v701 = vunpack.c.l.b16 %v665
          %v702 = vunpack.c.l.b16 %v666
          %v703 = vunpack.c.l.b16 %v667
          %v704 = vunpack.c.l.b16 %v668
          %v705 = vunpack.c.l.b16 %v669
          %v706 = vunpack.c.l.b16 %v670
          %v707 = vunpack.c.l.b16 %v671
          %v708 = vunpack.c.l.b16 %v672
          %v709 = vpack.c.b16 %v694, %v693
          %v710 = vpack.c.b16 %v696, %v695
          %v711 = vpack.c.b16 %v698, %v697
          %v712 = vpack.c.b16 %v700, %v699
          %v713 = vpack.c.b16 %v702, %v701
          %v714 = vpack.c.b16 %v704, %v703
          %v715 = vpack.c.b16 %v706, %v705
          %v716 = vpack.c.b16 %v708, %v707
          %725 = vmatpush.bf16.msra.mxu0 %v716
          %726 = vmatpush.bf16.msra.mxu0 %v715
          %727 = vmatpush.bf16.msra.mxu0 %v714
          %728 = vmatpush.bf16.msra.mxu0 %v713
          %729 = vmatpush.bf16.msra.mxu0 %v712
          %730 = vmatpush.bf16.msra.mxu0 %v711
          %731 = vmatpush.bf16.msra.mxu0 %v710
          %732 = vmatpush.bf16.msra.mxu0 %v709
          %733 = vmatmul.bf16.gmra.mxu0 %v593
          %v734 = vpop.f32.mrf.mxu0
          %v735 = vadd.f32 %v675, %v734
          %v736 = vpop.f32.mrf.mxu0
          %v737 = vadd.f32 %v675, %v736
          %738 = vdwg.mxu0
          %v739 = vpack.c.bf16 %v653, %v653
          %v740 = vpack.c.bf16 %v655, %v655
          %v741 = vpack.c.bf16 %v735, %v735
          %v742 = vpack.c.bf16 %v737, %v737
          %vm743 = vcmask 257024
          %744 = vst.msk [vmem:[#allocation2] sm:$0xf] %vm743, %v739
          %745 = vst.msk [vmem:[#allocation2 + $0x4] sm:$0xf] %vm743, %v740
          %746 = vst.msk [vmem:[#allocation3] sm:$0xf] %vm743, %v741
          %747 = vst.msk [vmem:[#allocation3 + $0x4] sm:$0xf] %vm743, %v742
          %750 = vrot.lane.b32.xlu0 %v739, 96
          %v751 = vpop.permute.xlu0 %750
          %752 = vrot.lane.b32.xlu0 %v740, 96
          %v753 = vpop.permute.xlu0 %752
          %s756 = scalar_lea.vmem [#allocation2], 8
          %757 = vst.msk [vmem:[%s756] sm:$0xf] %vm743, %v751
          %758 = vst.msk [vmem:[%s756 + $0x4] sm:$0xf] %vm743, %v753
          %761 = vrot.lane.b32.xlu0 %v741, 96
          %v762 = vpop.permute.xlu0 %761
          %763 = vrot.lane.b32.xlu0 %v742, 96
          %v764 = vpop.permute.xlu0 %763
          %s767 = scalar_lea.vmem [#allocation3], 8
          %768 = vst.msk [vmem:[%s767] sm:$0xf] %vm743, %v762
          %769 = vst.msk [vmem:[%s767 + $0x4] sm:$0xf] %vm743, %v764
          %770 = vrot.lane.b32.xlu0 %v739, 64
          %v771 = vpop.permute.xlu0 %770
          %772 = vrot.lane.b32.xlu0 %v740, 64
          %v773 = vpop.permute.xlu0 %772
          %s776 = scalar_lea.vmem [#allocation2], 16
          %777 = vst.msk [vmem:[%s776] sm:$0xf] %vm743, %v771
          %778 = vst.msk [vmem:[%s776 + $0x4] sm:$0xf] %vm743, %v773
          %779 = vrot.lane.b32.xlu0 %v741, 64
          %v780 = vpop.permute.xlu0 %779
          %781 = vrot.lane.b32.xlu0 %v742, 64
          %v782 = vpop.permute.xlu0 %781
          %s785 = scalar_lea.vmem [#allocation3], 16
          %786 = vst.msk [vmem:[%s785] sm:$0xf] %vm743, %v780
          %787 = vst.msk [vmem:[%s785 + $0x4] sm:$0xf] %vm743, %v782
          %788 = vrot.lane.b32.xlu0 %v739, 32
          %v789 = vpop.permute.xlu0 %788
          %790 = vrot.lane.b32.xlu0 %v740, 32
          %v791 = vpop.permute.xlu0 %790
          %s794 = scalar_lea.vmem [#allocation2], 24
          %795 = vst.msk [vmem:[%s794] sm:$0xf] %vm743, %v789
          %796 = vst.msk [vmem:[%s794 + $0x4] sm:$0xf] %vm743, %v791
          %797 = vrot.lane.b32.xlu0 %v741, 32
          %v798 = vpop.permute.xlu0 %797
          %799 = vrot.lane.b32.xlu0 %v742, 32
          %v800 = vpop.permute.xlu0 %799
          %s803 = scalar_lea.vmem [#allocation3], 24
          %804 = vst.msk [vmem:[%s803] sm:$0xf] %vm743, %v798
          %805 = vst.msk [vmem:[%s803 + $0x4] sm:$0xf] %vm743, %v800
        $region96: #{tpu_custom_call.1} parent=63 // pred_fallthru
          _
        %v806 = vld [vmem:[%s474] sm:$0xf]
        %v807 = vld [vmem:[#allocation12] sm:$0xf]
        %v808 = vld [vmem:[#allocation12 + $0x4] sm:$0xf]
        %v809 = vld [vmem:[#allocation12 + $0x8] sm:$0xf]
        %v810 = vld [vmem:[#allocation12 + $0xc] sm:$0xf]
        %v811 = vld [vmem:[#allocation12 + $0x10] sm:$0xf]
        %v812 = vld [vmem:[#allocation12 + $0x14] sm:$0xf]
        %v813 = vld [vmem:[#allocation12 + $0x18] sm:$0xf]
        %v814 = vld [vmem:[#allocation12 + $0x1c] sm:$0xf]
        %v815 = vld [vmem:[#allocation12 + $0x20] sm:$0xf]
        %v816 = vld [vmem:[#allocation12 + $0x24] sm:$0xf]
        %v817 = vld [vmem:[#allocation12 + $0x28] sm:$0xf]
        %v818 = vld [vmem:[#allocation12 + $0x2c] sm:$0xf]
        %v819 = vld [vmem:[#allocation12 + $0x30] sm:$0xf]
        %v820 = vld [vmem:[#allocation12 + $0x34] sm:$0xf]
        %v821 = vld [vmem:[#allocation12 + $0x38] sm:$0xf]
        %v822 = vld [vmem:[#allocation12 + $0x3c] sm:$0xf]
        %v823 = vld [vmem:[%s4] sm:$0x1]
        %v825 = vperm.slane %v823, 0
        %v843 = vunpack.c.l.b16 %v807
        %v844 = vunpack.c.l.b16 %v808
        %v845 = vunpack.c.l.b16 %v809
        %v846 = vunpack.c.l.b16 %v810
        %v847 = vunpack.c.l.b16 %v811
        %v848 = vunpack.c.l.b16 %v812
        %v849 = vunpack.c.l.b16 %v813
        %v850 = vunpack.c.l.b16 %v814
        %v851 = vunpack.c.l.b16 %v815
        %v852 = vunpack.c.l.b16 %v816
        %v853 = vunpack.c.l.b16 %v817
        %v854 = vunpack.c.l.b16 %v818
        %v855 = vunpack.c.l.b16 %v819
        %v856 = vunpack.c.l.b16 %v820
        %v857 = vunpack.c.l.b16 %v821
        %v858 = vunpack.c.l.b16 %v822
        %v859 = vpack.c.b16 %v844, %v843
        %v860 = vpack.c.b16 %v846, %v845
        %v861 = vpack.c.b16 %v848, %v847
        %v862 = vpack.c.b16 %v850, %v849
        %v863 = vpack.c.b16 %v852, %v851
        %v864 = vpack.c.b16 %v854, %v853
        %v865 = vpack.c.b16 %v856, %v855
        %v866 = vpack.c.b16 %v858, %v857
        %875 = vmatpush.bf16.msra.mxu0 %v866
        %876 = vmatpush.bf16.msra.mxu0 %v865
        %877 = vmatpush.bf16.msra.mxu0 %v864
        %878 = vmatpush.bf16.msra.mxu0 %v863
        %879 = vmatpush.bf16.msra.mxu0 %v862
        %880 = vmatpush.bf16.msra.mxu0 %v861
        %881 = vmatpush.bf16.msra.mxu0 %v860
        %882 = vmatpush.bf16.msra.mxu0 %v859
        %883 = vmatmul.bf16.gmra.mxu0 %v806
        %v884 = vpop.f32.mrf.mxu0
        %v885 = vadd.f32 %v825, %v884
        %v886 = vpop.f32.mrf.mxu0
        %887 = vdwg.mxu0
        %v888 = vpack.c.bf16 %v885, %v885
        %vm889 = vcmask 257024
        %890 = vst.msk [vmem:[#allocation4] sm:$0xf] %vm889, %v888
        %892 = vrot.lane.b32.xlu0 %v888, 96
        %v893 = vpop.permute.xlu0 %892
        %s895 = scalar_lea.vmem [#allocation4], 4
        %896 = vst.msk [vmem:[%s895] sm:$0xf] %vm889, %v893
        %897 = vrot.lane.b32.xlu0 %v888, 64
        %v898 = vpop.permute.xlu0 %897
        %s900 = scalar_lea.vmem [#allocation4], 8
        %901 = vst.msk [vmem:[%s900] sm:$0xf] %vm889, %v898
        %902 = vrot.lane.b32.xlu0 %v888, 32
        %v903 = vpop.permute.xlu0 %902
        %s905 = scalar_lea.vmem [#allocation4], 12
        %906 = vst.msk [vmem:[%s905] sm:$0xf] %vm889, %v903
        %v907 = vld [vmem:[#allocation4] sm:$0xf]
        %v908 = vld [vmem:[#allocation4 + $0x4] sm:$0xf]
        %v909 = vld [vmem:[#allocation4 + $0x8] sm:$0xf]
        %v910 = vld [vmem:[#allocation4 + $0xc] sm:$0xf]
        %v911 = vld [vmem:[#allocation2] sm:$0xf]
        %v912 = vld [vmem:[#allocation2 + $0x4] sm:$0xf]
        %v913 = vld [vmem:[#allocation2 + $0x8] sm:$0xf]
        %v914 = vld [vmem:[#allocation2 + $0xc] sm:$0xf]
        %v915 = vld [vmem:[#allocation2 + $0x10] sm:$0xf]
        %v916 = vld [vmem:[#allocation2 + $0x14] sm:$0xf]
        %v917 = vld [vmem:[#allocation2 + $0x18] sm:$0xf]
        %v918 = vld [vmem:[#allocation2 + $0x1c] sm:$0xf]
        %v919 = vld [vmem:[#allocation3] sm:$0xf]
        %v920 = vld [vmem:[#allocation3 + $0x4] sm:$0xf]
        %v921 = vld [vmem:[#allocation3 + $0x8] sm:$0xf]
        %v922 = vld [vmem:[#allocation3 + $0xc] sm:$0xf]
        %v923 = vld [vmem:[#allocation3 + $0x10] sm:$0xf]
        %v924 = vld [vmem:[#allocation3 + $0x14] sm:$0xf]
        %v925 = vld [vmem:[#allocation3 + $0x18] sm:$0xf]
        %v926 = vld [vmem:[#allocation3 + $0x1c] sm:$0xf]
        %v927 = vld [vmem:[%s493] sm:$0x1]
        %v929 = vperm.slane %v927, 0
        %v933 = vunpack.c.l.b16 %v911
        %v934 = vunpack.c.l.b16 %v912
        %v935 = vpack.c.b16 %v934, %v933
        %vm936 = vcmask 261120
        %v938 = vsel %vm936, %v907, 0
        %v941 = vsel %vm936, %v935, 0
        %943 = vmatpush.bf16.xpose.msra.mxu0 0
        %944 = vmatpush.bf16.xpose.msra.mxu0 0
        %945 = vmatpush.bf16.xpose.msra.mxu0 0
        %946 = vmatpush.bf16.xpose.msra.mxu0 0
        %947 = vmatpush.bf16.xpose.msra.mxu0 0
        %948 = vmatpush.bf16.xpose.msra.mxu0 0
        %949 = vmatpush.bf16.xpose.msra.mxu0 0
        %950 = vmatpush.bf16.xpose.msra.mxu0 %v941
        %951 = vmatmul.bf16.gmra.mxu0 %v938
        %v952 = vpop.f32.mrf.mxu0
        %v953 = vadd.f32 %v929, %v952
        %v954 = vpop.f32.mrf.mxu0
        %955 = vdwg.mxu0
        %v958 = vunpack.c.l.b16 %v913
        %v959 = vunpack.c.l.b16 %v914
        %v960 = vpack.c.b16 %v959, %v958
        %v962 = vsel %vm936, %v908, 0
        %v965 = vsel %vm936, %v960, 0
        %967 = vmatpush.bf16.xpose.msra.mxu0 0
        %968 = vmatpush.bf16.xpose.msra.mxu0 0
        %969 = vmatpush.bf16.xpose.msra.mxu0 0
        %970 = vmatpush.bf16.xpose.msra.mxu0 0
        %971 = vmatpush.bf16.xpose.msra.mxu0 0
        %972 = vmatpush.bf16.xpose.msra.mxu0 0
        %973 = vmatpush.bf16.xpose.msra.mxu0 0
        %974 = vmatpush.bf16.xpose.msra.mxu0 %v965
        %975 = vmatmul.bf16.gmra.mxu0 %v962
        %v976 = vpop.f32.mrf.mxu0
        %v977 = vadd.f32 %v929, %v976
        %v978 = vpop.f32.mrf.mxu0
        %979 = vdwg.mxu0
        %v982 = vunpack.c.l.b16 %v915
        %v983 = vunpack.c.l.b16 %v916
        %v984 = vpack.c.b16 %v983, %v982
        %v986 = vsel %vm936, %v909, 0
        %v989 = vsel %vm936, %v984, 0
        %991 = vmatpush.bf16.xpose.msra.mxu0 0
        %992 = vmatpush.bf16.xpose.msra.mxu0 0
        %993 = vmatpush.bf16.xpose.msra.mxu0 0
        %994 = vmatpush.bf16.xpose.msra.mxu0 0
        %995 = vmatpush.bf16.xpose.msra.mxu0 0
        %996 = vmatpush.bf16.xpose.msra.mxu0 0
        %997 = vmatpush.bf16.xpose.msra.mxu0 0
        %998 = vmatpush.bf16.xpose.msra.mxu0 %v989
        %999 = vmatmul.bf16.gmra.mxu0 %v986
        %v1000 = vpop.f32.mrf.mxu0
        %v1001 = vadd.f32 %v929, %v1000
        %v1002 = vpop.f32.mrf.mxu0
        %1003 = vdwg.mxu0
        %v1006 = vunpack.c.l.b16 %v917
        %v1007 = vunpack.c.l.b16 %v918
        %v1008 = vpack.c.b16 %v1007, %v1006
        %v1010 = vsel %vm936, %v910, 0
        %v1013 = vsel %vm936, %v1008, 0
        %1015 = vmatpush.bf16.xpose.msra.mxu0 0
        %1016 = vmatpush.bf16.xpose.msra.mxu0 0
        %1017 = vmatpush.bf16.xpose.msra.mxu0 0
        %1018 = vmatpush.bf16.xpose.msra.mxu0 0
        %1019 = vmatpush.bf16.xpose.msra.mxu0 0
        %1020 = vmatpush.bf16.xpose.msra.mxu0 0
        %1021 = vmatpush.bf16.xpose.msra.mxu0 0
        %1022 = vmatpush.bf16.xpose.msra.mxu0 %v1013
        %1023 = vmatmul.bf16.gmra.mxu0 %v1010
        %v1024 = vpop.f32.mrf.mxu0
        %v1025 = vadd.f32 %v929, %v1024
        %v1026 = vpop.f32.mrf.mxu0
        %1027 = vdwg.mxu0
        %vm1028 = vcmask 130048
        %v1029 = vsel %vm1028, %v953, -inf
        %1030 = vmax.xlane.f32.xlu0 %v1029
        %v1031 = vpop.xlane.xlu0 %1030
        %v1032 = vsel %vm1028, %v977, -inf
        %1033 = vmax.xlane.f32.xlu0 %v1032
        %v1034 = vpop.xlane.xlu0 %1033
        %v1035 = vsel %vm1028, %v1001, -inf
        %1036 = vmax.xlane.f32.xlu0 %v1035
        %v1037 = vpop.xlane.xlu0 %1036
        %v1038 = vsel %vm1028, %v1025, -inf
        %1039 = vmax.xlane.f32.xlu0 %v1038
        %v1040 = vpop.xlane.xlu0 %1039
        %v1041 = vsub.f32 %v953, %v1031
        %v1042 = vsub.f32 %v977, %v1034
        %v1043 = vsub.f32 %v1001, %v1037
        %v1044 = vsub.f32 %v1025, %v1040
        %v1045 = vmul.f32 %v1041, 1.442695
        %v1046 = vpow.pop %v1045
        %v1047 = vmul.f32 %v1042, 1.442695
        %v1048 = vpow.pop %v1047
        %v1049 = vmul.f32 %v1043, 1.442695
        %v1050 = vpow.pop %v1049
        %v1051 = vmul.f32 %v1044, 1.442695
        %v1052 = vpow.pop %v1051
        %v1053 = vsel %vm1028, %v1046, 0.0
        %1054 = vadd.xlane.f32.xlu0 %v1053
        %v1055 = vpop.xlane.xlu0 %1054
        %v1056 = vsel %vm1028, %v1048, 0.0
        %1057 = vadd.xlane.f32.xlu0 %v1056
        %v1058 = vpop.xlane.xlu0 %1057
        %v1059 = vsel %vm1028, %v1050, 0.0
        %1060 = vadd.xlane.f32.xlu0 %v1059
        %v1061 = vpop.xlane.xlu0 %1060
        %v1062 = vsel %vm1028, %v1052, 0.0
        %1063 = vadd.xlane.f32.xlu0 %v1062
        %v1064 = vpop.xlane.xlu0 %1063
        %v1065 = vpack.c.bf16 %v1046, %v1046
        %v1066 = vpack.c.bf16 %v1048, %v1048
        %v1067 = vpack.c.bf16 %v1050, %v1050
        %v1068 = vpack.c.bf16 %v1052, %v1052
        %v1071 = vunpack.c.l.b16 %v919
        %v1072 = vunpack.c.l.b16 %v920
        %v1073 = vpack.c.b16 %v1072, %v1071
        %v1076 = vsel %vm1028, %v1065, 0
        %1078 = vmatpush.bf16.msra.mxu0 0
        %1079 = vmatpush.bf16.msra.mxu0 0
        %1080 = vmatpush.bf16.msra.mxu0 0
        %1081 = vmatpush.bf16.msra.mxu0 0
        %1082 = vmatpush.bf16.msra.mxu0 0
        %1083 = vmatpush.bf16.msra.mxu0 0
        %1084 = vmatpush.bf16.msra.mxu0 0
        %1085 = vmatpush.bf16.msra.mxu0 %v1073
        %1086 = vmatmul.bf16.gmra.mxu0 %v1076
        %v1087 = vpop.f32.mrf.mxu0
        %v1088 = vadd.f32 0.0, %v1087
        %v1089 = vpop.f32.mrf.mxu0
        %1090 = vdwg.mxu0
        %v1093 = vunpack.c.l.b16 %v921
        %v1094 = vunpack.c.l.b16 %v922
        %v1095 = vpack.c.b16 %v1094, %v1093
        %v1098 = vsel %vm1028, %v1066, 0
        %1100 = vmatpush.bf16.msra.mxu0 0
        %1101 = vmatpush.bf16.msra.mxu0 0
        %1102 = vmatpush.bf16.msra.mxu0 0
        %1103 = vmatpush.bf16.msra.mxu0 0
        %1104 = vmatpush.bf16.msra.mxu0 0
        %1105 = vmatpush.bf16.msra.mxu0 0
        %1106 = vmatpush.bf16.msra.mxu0 0
        %1107 = vmatpush.bf16.msra.mxu0 %v1095
        %1108 = vmatmul.bf16.gmra.mxu0 %v1098
        %v1109 = vpop.f32.mrf.mxu0
        %v1110 = vadd.f32 0.0, %v1109
        %v1111 = vpop.f32.mrf.mxu0
        %1112 = vdwg.mxu0
        %v1115 = vunpack.c.l.b16 %v923
        %v1116 = vunpack.c.l.b16 %v924
        %v1117 = vpack.c.b16 %v1116, %v1115
        %v1120 = vsel %vm1028, %v1067, 0
        %1122 = vmatpush.bf16.msra.mxu0 0
        %1123 = vmatpush.bf16.msra.mxu0 0
        %1124 = vmatpush.bf16.msra.mxu0 0
        %1125 = vmatpush.bf16.msra.mxu0 0
        %1126 = vmatpush.bf16.msra.mxu0 0
        %1127 = vmatpush.bf16.msra.mxu0 0
        %1128 = vmatpush.bf16.msra.mxu0 0
        %1129 = vmatpush.bf16.msra.mxu0 %v1117
        %1130 = vmatmul.bf16.gmra.mxu0 %v1120
        %v1131 = vpop.f32.mrf.mxu0
        %v1132 = vadd.f32 0.0, %v1131
        %v1133 = vpop.f32.mrf.mxu0
        %1134 = vdwg.mxu0
        %v1137 = vunpack.c.l.b16 %v925
        %v1138 = vunpack.c.l.b16 %v926
        %v1139 = vpack.c.b16 %v1138, %v1137
        %v1142 = vsel %vm1028, %v1068, 0
        %1144 = vmatpush.bf16.msra.mxu0 0
        %1145 = vmatpush.bf16.msra.mxu0 0
        %1146 = vmatpush.bf16.msra.mxu0 0
        %1147 = vmatpush.bf16.msra.mxu0 0
        %1148 = vmatpush.bf16.msra.mxu0 0
        %1149 = vmatpush.bf16.msra.mxu0 0
        %1150 = vmatpush.bf16.msra.mxu0 0
        %1151 = vmatpush.bf16.msra.mxu0 %v1139
        %1152 = vmatmul.bf16.gmra.mxu0 %v1142
        %v1153 = vpop.f32.mrf.mxu0
        %v1154 = vadd.f32 0.0, %v1153
        %v1155 = vpop.f32.mrf.mxu0
        %1156 = vdwg.mxu0
        %v1157 = vrcp.pop %v1055
        %v1158 = vrcp.pop %v1058
        %v1159 = vrcp.pop %v1061
        %v1160 = vrcp.pop %v1064
        %v1161 = vmul.f32 %v1088, %v1157
        %v1162 = vmul.f32 %v1110, %v1158
        %v1163 = vmul.f32 %v1132, %v1159
        %v1164 = vmul.f32 %v1154, %v1160
        %v1165 = vpack.c.bf16 %v1161, %v1161
        %1166 = vst.msk [vmem:[#allocation5] sm:$0xf] %vm889, %v1165
        %v1167 = vpack.c.bf16 %v1162, %v1162
        %1169 = vrot.lane.b32.xlu0 %v1167, 32
        %v1170 = vpop.permute.xlu0 %1169
        %vm1172 = vcmask 519424
        %1173 = vst.msk [vmem:[#allocation5] sm:$0xf] %vm1172, %v1170
        %v1174 = vpack.c.bf16 %v1163, %v1163
        %1176 = vrot.lane.b32.xlu0 %v1174, 64
        %v1177 = vpop.permute.xlu0 %1176
        %vm1179 = vcmask 781824
        %1180 = vst.msk [vmem:[#allocation5] sm:$0xf] %vm1179, %v1177
        %v1181 = vpack.c.bf16 %v1164, %v1164
        %1183 = vrot.lane.b32.xlu0 %v1181, 96
        %v1184 = vpop.permute.xlu0 %1183
        %vm1186 = vcmask 1044224
        %1187 = vst.msk [vmem:[#allocation5] sm:$0xf] %vm1186, %v1184
        %v1188 = vld [vmem:[#allocation5] sm:$0xf]
        %v1189 = vld [vmem:[#allocation17] sm:$0xf]
        %v1190 = vld [vmem:[#allocation17 + $0x4] sm:$0xf]
        %v1191 = vld [vmem:[#allocation17 + $0x8] sm:$0xf]
        %v1192 = vld [vmem:[#allocation17 + $0xc] sm:$0xf]
        %v1193 = vld [vmem:[#allocation17 + $0x10] sm:$0xf]
        %v1194 = vld [vmem:[#allocation17 + $0x14] sm:$0xf]
        %v1195 = vld [vmem:[#allocation17 + $0x18] sm:$0xf]
        %v1196 = vld [vmem:[#allocation17 + $0x1c] sm:$0xf]
        %v1197 = vld [vmem:[#allocation17 + $0x20] sm:$0xf]
        %v1198 = vld [vmem:[#allocation17 + $0x24] sm:$0xf]
        %v1199 = vld [vmem:[#allocation17 + $0x28] sm:$0xf]
        %v1200 = vld [vmem:[#allocation17 + $0x2c] sm:$0xf]
        %v1201 = vld [vmem:[#allocation17 + $0x30] sm:$0xf]
        %v1202 = vld [vmem:[#allocation17 + $0x34] sm:$0xf]
        %v1203 = vld [vmem:[#allocation17 + $0x38] sm:$0xf]
        %v1204 = vld [vmem:[#allocation17 + $0x3c] sm:$0xf]
        %v1205 = vld [vmem:[%s10] sm:$0x1]
        %v1207 = vperm.slane %v1205, 0
        %v1225 = vunpack.c.l.b16 %v1189
        %v1226 = vunpack.c.l.b16 %v1190
        %v1227 = vunpack.c.l.b16 %v1191
        %v1228 = vunpack.c.l.b16 %v1192
        %v1229 = vunpack.c.l.b16 %v1193
        %v1230 = vunpack.c.l.b16 %v1194
        %v1231 = vunpack.c.l.b16 %v1195
        %v1232 = vunpack.c.l.b16 %v1196
        %v1233 = vunpack.c.l.b16 %v1197
        %v1234 = vunpack.c.l.b16 %v1198
        %v1235 = vunpack.c.l.b16 %v1199
        %v1236 = vunpack.c.l.b16 %v1200
        %v1237 = vunpack.c.l.b16 %v1201
        %v1238 = vunpack.c.l.b16 %v1202
        %v1239 = vunpack.c.l.b16 %v1203
        %v1240 = vunpack.c.l.b16 %v1204
        %v1241 = vpack.c.b16 %v1226, %v1225
        %v1242 = vpack.c.b16 %v1228, %v1227
        %v1243 = vpack.c.b16 %v1230, %v1229
        %v1244 = vpack.c.b16 %v1232, %v1231
        %v1245 = vpack.c.b16 %v1234, %v1233
        %v1246 = vpack.c.b16 %v1236, %v1235
        %v1247 = vpack.c.b16 %v1238, %v1237
        %v1248 = vpack.c.b16 %v1240, %v1239
        %1257 = vmatpush.bf16.msra.mxu0 %v1248
        %1258 = vmatpush.bf16.msra.mxu0 %v1247
        %1259 = vmatpush.bf16.msra.mxu0 %v1246
        %1260 = vmatpush.bf16.msra.mxu0 %v1245
        %1261 = vmatpush.bf16.msra.mxu0 %v1244
        %1262 = vmatpush.bf16.msra.mxu0 %v1243
        %1263 = vmatpush.bf16.msra.mxu0 %v1242
        %1264 = vmatpush.bf16.msra.mxu0 %v1241
        %1265 = vmatmul.bf16.gmra.mxu0 %v1188
        %v1266 = vpop.f32.mrf.mxu0
        %v1267 = vadd.f32 %v1207, %v1266
        %v1268 = vpop.f32.mrf.mxu0
        %1269 = vdwg.mxu0
        %1270 = vst [vmem:[%s561] sm:$0xff] %v1267
        %s1271 = sand.u32 %s303, 1
        %s1272 = scalar_lea.sflag [#allocation8], %s1271
        %s1273 = sand.u32 %s303, 1
        %s1274 = smul.addr %s1273, 8
        %s1275 = scalar_lea.vmem [#allocation18], %s1274
        // Predicated region
        $region97: #{tpu_custom_call.1} parent=63 // pred_check
          %p1276 = pneg %p313
        $region98: #{tpu_custom_call.1} parent=63 // pred_check_branch
          %1278 = sbr.rel (%p1276) target = $region100
        $region99: #{tpu_custom_call.1} parent=63 // pred_region
          %1280 = vsyncadd %s1272, 0
          %s1281 = smul.addr %s37, 2
          %s1282 = sadd.s32 %s38, %s1281
          %s1283 = smul.addr %s1282, 8
          %s1284 = scalar_lea.hbm %s11, %s1283
          %s1286 = sshll.u32 %s1275, 4
          %s1287 = int_to_ptr.vmem [resolvable:$true] %s1286
          %s1288 = sshll.u32 %s1284, 4
          %s1289 = int_to_ptr.hbm [resolvable:$true] %s1288
          %1291 = dma.vmem_to_hbm [thread:$0]  %s1287, 128, %s1289, %s1272
        $region100: #{tpu_custom_call.1} parent=63 // pred_fallthru
          _
      $region64: #{tpu_custom_call.1} parent=5 // pred_fallthru
        _
      %p1292 = scmp.le.s32.totalorder 2, %s28
      // Predicated region
      $region101: #{tpu_custom_call.1} parent=5 // pred_check
        %p1293 = pneg %p1292
      $region102: #{tpu_custom_call.1} parent=5 // pred_check_branch
        %1295 = sbr.rel (%p1293) target = $region104
      $region103: #{tpu_custom_call.1} parent=5 // pred_region
        %s1296 = ssub.s32 %s28, 2
        // Predicated region
        $region105: #{tpu_custom_call.1} parent=103 // pred_check
          %p1297 = pneg %p319
        $region106: #{tpu_custom_call.1} parent=103 // pred_check_branch
          %1299 = sbr.rel (%p1297) target = $region108
        $region107: #{tpu_custom_call.1} parent=103 // pred_region
          %s1300 = sand.u32 %s304, 1
          %s1301 = scalar_lea.sflag [#allocation8], %s1300
          %s1302 = sand.u32 %s304, 1
          %s1303 = smul.addr %s1302, 8
          %s1304 = scalar_lea.vmem [#allocation18], %s1303
          %1306 = dma.done %s1301, 128
        $region108: #{tpu_custom_call.1} parent=103 // pred_fallthru
          _
      $region104: #{tpu_custom_call.1} parent=5 // pred_fallthru
        _
    $region6: #{tpu_custom_call.1} parent=1 // loop_footer
      %s32 = sadd.s32 1, %s28
    $region7: #{tpu_custom_call.1} parent=1 // loop_footer_branch
      %27 = sbr.rel target = $region3
    $region8: #{tpu_custom_call.1} parent=1 // loop_exit
      _
    %1307 = vsyncpa [#allocation7], 1
    %s1308 = scalar_lea.sflag [#allocation7], 1
    %1309 = vsyncpa %s1308, 1
    %1310 = vsyncpa [#allocation10], 1
    %s1311 = scalar_lea.sflag [#allocation10], 1
    %1312 = vsyncpa %s1311, 1
    %1313 = vsyncpa [#allocation13], 1
    %1314 = vsyncpa [#allocation16], 1
    %1315 = vsyncpa [#allocation8], 1
    %s1316 = scalar_lea.sflag [#allocation8], 1
    %1317 = vsyncpa %s1316, 1

</llo_original>
